<compile_context>
chip_gen: v7x
topology: tpu7x:2x2x1
jax: 0.10.0
libtpu: 0.0.40
codegen_flags: <defaults>
</compile_context>

<pallas_src>
import jax
import jax.numpy as jnp
from jax.experimental import pallas as pl
from jax.experimental.pallas import tpu as pltpu


def _round_up(n, m):
    return ((n + m - 1) // m) * m


def _cdiv(a, b):
    return -(-a // b)


def forthnet_kernel(x_ref,
                    w0, b0, w1, b1, w2, b2, w3, b3, w4, b4, w5, b5,
                    o_ref):
    """Fused MLP forward on one batch tile.

    x_ref: (TB, image_size) f32 (cast to bf16 in-kernel).  Weights bf16 (lane-padded
    to 128-wide), biases f32.  Output (TB, 128); last-layer pad columns carry bias
    -1e30 so they contribute exp() == 0 to the softmax and are sliced off outside.
    """
    def lin(h, w_ref, b_ref):
        # bf16 x bf16 -> f32 accumulate on the MXU; bias add in f32 on the VPU.
        return jnp.dot(h, w_ref[...], preferred_element_type=jnp.float32) + b_ref[...]

    def lin_relu(h, w_ref, b_ref):
        # ReLU in f32, requantize (lane-dense) to bf16 for the next MXU pass.
        return jnp.maximum(lin(h, w_ref, b_ref), 0.0).astype(jnp.bfloat16)

    # f32 tile straight from HBM -> bf16 just before the MXU (no wrapper-side pass).
    h = x_ref[...].astype(jnp.bfloat16)
    h = lin_relu(h, w0, b0)
    h = lin_relu(h, w1, b1)
    h = lin_relu(h, w2, b2)
    h = lin_relu(h, w3, b3)
    h = lin_relu(h, w4, b4)
    logits = lin(h, w5, b5)                      # (TB, 128) f32, pad cols ~ -1e30

    # log_softmax along features (pad columns contribute exp(-huge) == 0).
    m = jnp.max(logits, axis=1, keepdims=True)
    z = logits - m
    lse = jnp.log(jnp.sum(jnp.exp(z), axis=1, keepdims=True))
    o_ref[...] = (z - lse).astype(o_ref.dtype)


def _const_spec(shape):
    """Weights/biases: full-array block, constant index_map -> VMEM-resident.

    They never change across grid steps, so request a single buffer (no idle double
    buffer / per-step bookkeeping).  Fall back silently on older jax."""
    try:
        return pl.BlockSpec(shape, lambda i: (0, 0), pipeline_mode=pl.Buffered(1))
    except (AttributeError, TypeError):
        return pl.BlockSpec(shape, lambda i: (0, 0))


def forthnet_forward(x, params, *, tb_max=1024, out_dtype=jnp.float32):
    """x: any shape whose trailing dims flatten to image_size (NCHW accepted).
    params: list of (W, b) pairs, W as (in, out) f32, b as (1, out) f32.
    out_dtype: set to jnp.bfloat16 to halve output writeback if downstream tolerates it."""
    image_size = params[0][0].shape[0]
    out_dim = params[-1][0].shape[1]              # 10
    x2d = x.reshape(-1, image_size).astype(jnp.float32)   # == x.view(-1, image_size)
    B = x2d.shape[0]

    SUBLANE = 8                                    # f32 sublane packing
    LANE = 128

    # --- adaptive batch tiling -------------------------------------------------
    # Cap TB so the double-buffered f32 x tile stays <= ~32 MiB of VMEM.
    tb_cap = max(SUBLANE, ((16 * 1024 * 1024) // (image_size * 4)) // SUBLANE * SUBLANE)
    tb_max = max(SUBLANE, min(tb_max, tb_cap))

    num_tiles = _cdiv(B, tb_max)
    # >= 2 grid steps when the batch justifies it: engages v7x megacore and keeps the
    # x DMA for step i+1 overlapped with step i's matmul chain on v5e/v6e.
    if num_tiles < 2 and B >= 2 * LANE:
        num_tiles = 2
    TB = _round_up(_cdiv(B, num_tiles), SUBLANE)   # near-equal tiles, little padding
    B_pad = TB * num_tiles

    if B_pad != B:
        # Only pad when B % TB != 0 (no extra HBM pass in the common divisible case).
        x2d = jnp.pad(x2d, ((0, B_pad - B), (0, 0)))

    # --- lane-dense parameters: pad every hidden / output width to 128 ----------
    # Zero pad weights/biases -> padded columns carry exactly-zero activations, so
    # the math is unchanged; last layer gets -1e30 pad bias so pad logits vanish.
    out_pad = _round_up(out_dim, LANE)             # 128
    n_layers = len(params)
    flat_params = []
    prev_pad = image_size
    for li, (w, b) in enumerate(params):
        fan_in, fan_out = w.shape
        this_pad = out_pad if li == n_layers - 1 else _round_up(fan_out, LANE)
        w = jnp.pad(w.astype(jnp.bfloat16),
                    ((0, prev_pad - fan_in), (0, this_pad - fan_out)))
        pad_bias = -1e30 if li == n_layers - 1 else 0.0
        b = jnp.pad(b.astype(jnp.float32).reshape(1, fan_out),
                    ((0, 0), (0, this_pad - fan_out)), constant_values=pad_bias)
        flat_params.extend([w, b])
        prev_pad = this_pad

    param_specs = [_const_spec(p.shape) for p in flat_params]

    # --- VMEM budget & cost estimate --------------------------------------------
    param_bytes = sum(int(p.size) * p.dtype.itemsize for p in flat_params)
    x_tile_bytes = TB * image_size * 4
    out_tile_bytes = TB * out_pad * jnp.dtype(out_dtype).itemsize
    vmem_need = 2 * x_tile_bytes + 2 * out_tile_bytes + 2 * param_bytes
    # size-to-need + slack; never claim the whole 64 MiB of a v7x TensorCore
    vmem_limit = int(min(max(vmem_need + (8 << 20), 16 << 20), 48 << 20))

    flops = 2 * B_pad * sum(int(flat_params[2 * i].size) for i in range(n_layers))
    bytes_accessed = (int(x2d.size) * 4 + param_bytes
                      + B_pad * out_pad * jnp.dtype(out_dtype).itemsize)

    out = pl.pallas_call(
        forthnet_kernel,
        out_shape=jax.ShapeDtypeStruct((B_pad, out_pad), out_dtype),
        grid=(num_tiles,),
        in_specs=[pl.BlockSpec((TB, image_size), lambda i: (i, 0))] + param_specs,
        out_specs=pl.BlockSpec((TB, out_pad), lambda i: (i, 0)),
        compiler_params=pltpu.CompilerParams(
            dimension_semantics=("parallel",),      # no carry -> megacore-shardable
            vmem_limit_bytes=vmem_limit),
        cost_estimate=pl.CostEstimate(
            flops=int(flops),
            transcendentals=int(B_pad * out_pad),   # exp in log_softmax
            bytes_accessed=int(bytes_accessed)),
    )(x2d, *flat_params)

    return out[:B, :out_dim]                        # drop batch / lane padding


def init_params(key, image_size):
    """Deterministic init mimicking nn.Linear's U(-1/sqrt(fan_in), 1/sqrt(fan_in))."""
    dims = [image_size, 128, 64, 10, 10, 10, 10]
    params = []
    for li in range(len(dims) - 1):
        fan_in, fan_out = dims[li], dims[li + 1]
        key, kw, kb = jax.random.split(key, 3)
        bound = 1.0 / jnp.sqrt(jnp.float32(fan_in))
        w = jax.random.uniform(kw, (fan_in, fan_out), jnp.float32, -bound, bound)
        b = jax.random.uniform(kb, (1, fan_out), jnp.float32, -bound, bound)
        params.append((w, b))
    return params


def reference_forward_f32(x, params):
    """Pure-JAX f32 reference (matches the PyTorch module semantics)."""
    image_size = params[0][0].shape[0]
    h = x.reshape(-1, image_size).astype(jnp.float32)
    for i, (w, b) in enumerate(params):
        h = h @ w + b
        if i < len(params) - 1:
            h = jnp.maximum(h, 0.0)
    return jax.nn.log_softmax(h, axis=1)


def reference_forward_bf16(x, params):
    """Pure-JAX reference with the same bf16 weight/activation quantization as the kernel."""
    image_size = params[0][0].shape[0]
    h = x.reshape(-1, image_size).astype(jnp.bfloat16)
    for i, (w, b) in enumerate(params):
        h = jnp.dot(h, w.astype(jnp.bfloat16),
                    preferred_element_type=jnp.float32) + b.astype(jnp.float32)
        if i < len(params) - 1:
            h = jnp.maximum(h, 0.0).astype(jnp.bfloat16)
    return jax.nn.log_softmax(h, axis=1)


if __name__ == "__main__":
    key = jax.random.PRNGKey(0)
    k_x, k_p = jax.random.split(key)

    # Input consistent with an NCHW image batch: (B=2, C=4, H=16, W=16) -> image_size = 1024
    B, C, H, W = 2, 4, 16, 16
    image_size = C * H * W
    x = jax.random.normal(k_x, (B, C, H, W), jnp.float32)

    params = init_params(k_p, image_size)

    out = forthnet_forward(x, params)
    out = jax.block_until_ready(out)
    assert out.shape == (B, 10), out.shape

    # Tight check against a reference using the same bf16 quantization as the kernel.
    ref_bf16 = reference_forward_bf16(x, params)
    assert jnp.allclose(out, ref_bf16, atol=1e-2, rtol=1e-2), "mismatch vs bf16-matched ref"

    # Looser check against the full-f32 module semantics (bf16 weight/activation error).
    ref_f32 = reference_forward_f32(x, params)
    assert jnp.allclose(out, ref_f32, atol=1e-1, rtol=1e-1), "mismatch vs f32 reference"

    print("KERNEL_OK")
</pallas_src>

<mosaic_0001>
module attributes {stable_mosaic.version = 11 : i64} {
  func.func @forthnet_kernel(%arg0: i32, %arg1: memref<8x1024xf32, #tpu.memory_space<vmem>>, %arg2: memref<1024x128xbf16, #tpu.memory_space<vmem>>, %arg3: memref<1x128xf32, #tpu.memory_space<vmem>>, %arg4: memref<128x128xbf16, #tpu.memory_space<vmem>>, %arg5: memref<1x128xf32, #tpu.memory_space<vmem>>, %arg6: memref<128x128xbf16, #tpu.memory_space<vmem>>, %arg7: memref<1x128xf32, #tpu.memory_space<vmem>>, %arg8: memref<128x128xbf16, #tpu.memory_space<vmem>>, %arg9: memref<1x128xf32, #tpu.memory_space<vmem>>, %arg10: memref<128x128xbf16, #tpu.memory_space<vmem>>, %arg11: memref<1x128xf32, #tpu.memory_space<vmem>>, %arg12: memref<128x128xbf16, #tpu.memory_space<vmem>>, %arg13: memref<1x128xf32, #tpu.memory_space<vmem>>, %arg14: memref<8x128xf32, #tpu.memory_space<vmem>>) attributes {dimension_semantics = [#tpu.dimension_semantics<parallel>], iteration_bounds = array<i64: 1>, scalar_prefetch = 0 : i64, scratch_operands = 0 : i64, tpu.core_type = #tpu.core_type<tc>, window_params = [{transform_indices = @transform_0, window_bounds = array<i64: 8, 1024>}, {pipeline_mode = #tpu.pipeline_mode<synchronous>, transform_indices = @transform_1, window_bounds = array<i64: 1024, 128>}, {pipeline_mode = #tpu.pipeline_mode<synchronous>, transform_indices = @transform_2, window_bounds = array<i64: 1, 128>}, {pipeline_mode = #tpu.pipeline_mode<synchronous>, transform_indices = @transform_3, window_bounds = array<i64: 128, 128>}, {pipeline_mode = #tpu.pipeline_mode<synchronous>, transform_indices = @transform_4, window_bounds = array<i64: 1, 128>}, {pipeline_mode = #tpu.pipeline_mode<synchronous>, transform_indices = @transform_5, window_bounds = array<i64: 128, 128>}, {pipeline_mode = #tpu.pipeline_mode<synchronous>, transform_indices = @transform_6, window_bounds = array<i64: 1, 128>}, {pipeline_mode = #tpu.pipeline_mode<synchronous>, transform_indices = @transform_7, window_bounds = array<i64: 128, 128>}, {pipeline_mode = #tpu.pipeline_mode<synchronous>, transform_indices = @transform_8, window_bounds = array<i64: 1, 128>}, {pipeline_mode = #tpu.pipeline_mode<synchronous>, transform_indices = @transform_9, window_bounds = array<i64: 128, 128>}, {pipeline_mode = #tpu.pipeline_mode<synchronous>, transform_indices = @transform_10, window_bounds = array<i64: 1, 128>}, {pipeline_mode = #tpu.pipeline_mode<synchronous>, transform_indices = @transform_11, window_bounds = array<i64: 128, 128>}, {pipeline_mode = #tpu.pipeline_mode<synchronous>, transform_indices = @transform_12, window_bounds = array<i64: 1, 128>}, {transform_indices = @transform_13, window_bounds = array<i64: 8, 128>}]} {
    %c0 = arith.constant 0 : index
    %c0_0 = arith.constant 0 : index
    %0 = vector.load %arg1[%c0, %c0_0] : memref<8x1024xf32, #tpu.memory_space<vmem>>, vector<8x1024xf32>
    %1 = arith.truncf %0 : vector<8x1024xf32> to vector<8x1024xbf16>
    %c0_1 = arith.constant 0 : index
    %c0_2 = arith.constant 0 : index
    %2 = vector.load %arg2[%c0_1, %c0_2] : memref<1024x128xbf16, #tpu.memory_space<vmem>>, vector<1024x128xbf16>
    %cst = arith.constant dense<0.000000e+00> : vector<8x128xf32>
    %3 = tpu.matmul %1, %2, %cst {dimension_numbers = #tpu.dot_dimension_numbers<[1], [0], [0], [1], [0, 0, 1, 1], [], []>} : vector<8x1024xbf16>, vector<1024x128xbf16>, vector<8x128xf32> -> vector<8x128xf32>
    %c0_3 = arith.constant 0 : index
    %c0_4 = arith.constant 0 : index
    %4 = vector.load %arg3[%c0_3, %c0_4] : memref<1x128xf32, #tpu.memory_space<vmem>>, vector<1x128xf32>
    %5 = vector.broadcast %4 : vector<1x128xf32> to vector<8x128xf32>
    %6 = arith.addf %3, %5 : vector<8x128xf32>
    %cst_5 = arith.constant 0.000000e+00 : f32
    %7 = vector.broadcast %cst_5 : f32 to vector<8x128xf32>
    %8 = arith.maximumf %6, %7 : vector<8x128xf32>
    %9 = arith.truncf %8 : vector<8x128xf32> to vector<8x128xbf16>
    %c0_6 = arith.constant 0 : index
    %c0_7 = arith.constant 0 : index
    %10 = vector.load %arg4[%c0_6, %c0_7] : memref<128x128xbf16, #tpu.memory_space<vmem>>, vector<128x128xbf16>
    %cst_8 = arith.constant dense<0.000000e+00> : vector<8x128xf32>
    %11 = tpu.matmul %9, %10, %cst_8 {dimension_numbers = #tpu.dot_dimension_numbers<[1], [0], [0], [1], [0, 0, 1, 1], [], []>} : vector<8x128xbf16>, vector<128x128xbf16>, vector<8x128xf32> -> vector<8x128xf32>
    %c0_9 = arith.constant 0 : index
    %c0_10 = arith.constant 0 : index
    %12 = vector.load %arg5[%c0_9, %c0_10] : memref<1x128xf32, #tpu.memory_space<vmem>>, vector<1x128xf32>
    %13 = vector.broadcast %12 : vector<1x128xf32> to vector<8x128xf32>
    %14 = arith.addf %11, %13 : vector<8x128xf32>
    %cst_11 = arith.constant 0.000000e+00 : f32
    %15 = vector.broadcast %cst_11 : f32 to vector<8x128xf32>
    %16 = arith.maximumf %14, %15 : vector<8x128xf32>
    %17 = arith.truncf %16 : vector<8x128xf32> to vector<8x128xbf16>
    %c0_12 = arith.constant 0 : index
    %c0_13 = arith.constant 0 : index
    %18 = vector.load %arg6[%c0_12, %c0_13] : memref<128x128xbf16, #tpu.memory_space<vmem>>, vector<128x128xbf16>
    %cst_14 = arith.constant dense<0.000000e+00> : vector<8x128xf32>
    %19 = tpu.matmul %17, %18, %cst_14 {dimension_numbers = #tpu.dot_dimension_numbers<[1], [0], [0], [1], [0, 0, 1, 1], [], []>} : vector<8x128xbf16>, vector<128x128xbf16>, vector<8x128xf32> -> vector<8x128xf32>
    %c0_15 = arith.constant 0 : index
    %c0_16 = arith.constant 0 : index
    %20 = vector.load %arg7[%c0_15, %c0_16] : memref<1x128xf32, #tpu.memory_space<vmem>>, vector<1x128xf32>
    %21 = vector.broadcast %20 : vector<1x128xf32> to vector<8x128xf32>
    %22 = arith.addf %19, %21 : vector<8x128xf32>
    %cst_17 = arith.constant 0.000000e+00 : f32
    %23 = vector.broadcast %cst_17 : f32 to vector<8x128xf32>
    %24 = arith.maximumf %22, %23 : vector<8x128xf32>
    %25 = arith.truncf %24 : vector<8x128xf32> to vector<8x128xbf16>
    %c0_18 = arith.constant 0 : index
    %c0_19 = arith.constant 0 : index
    %26 = vector.load %arg8[%c0_18, %c0_19] : memref<128x128xbf16, #tpu.memory_space<vmem>>, vector<128x128xbf16>
    %cst_20 = arith.constant dense<0.000000e+00> : vector<8x128xf32>
    %27 = tpu.matmul %25, %26, %cst_20 {dimension_numbers = #tpu.dot_dimension_numbers<[1], [0], [0], [1], [0, 0, 1, 1], [], []>} : vector<8x128xbf16>, vector<128x128xbf16>, vector<8x128xf32> -> vector<8x128xf32>
    %c0_21 = arith.constant 0 : index
    %c0_22 = arith.constant 0 : index
    %28 = vector.load %arg9[%c0_21, %c0_22] : memref<1x128xf32, #tpu.memory_space<vmem>>, vector<1x128xf32>
    %29 = vector.broadcast %28 : vector<1x128xf32> to vector<8x128xf32>
    %30 = arith.addf %27, %29 : vector<8x128xf32>
    %cst_23 = arith.constant 0.000000e+00 : f32
    %31 = vector.broadcast %cst_23 : f32 to vector<8x128xf32>
    %32 = arith.maximumf %30, %31 : vector<8x128xf32>
    %33 = arith.truncf %32 : vector<8x128xf32> to vector<8x128xbf16>
    %c0_24 = arith.constant 0 : index
    %c0_25 = arith.constant 0 : index
    %34 = vector.load %arg10[%c0_24, %c0_25] : memref<128x128xbf16, #tpu.memory_space<vmem>>, vector<128x128xbf16>
    %cst_26 = arith.constant dense<0.000000e+00> : vector<8x128xf32>
    %35 = tpu.matmul %33, %34, %cst_26 {dimension_numbers = #tpu.dot_dimension_numbers<[1], [0], [0], [1], [0, 0, 1, 1], [], []>} : vector<8x128xbf16>, vector<128x128xbf16>, vector<8x128xf32> -> vector<8x128xf32>
    %c0_27 = arith.constant 0 : index
    %c0_28 = arith.constant 0 : index
    %36 = vector.load %arg11[%c0_27, %c0_28] : memref<1x128xf32, #tpu.memory_space<vmem>>, vector<1x128xf32>
    %37 = vector.broadcast %36 : vector<1x128xf32> to vector<8x128xf32>
    %38 = arith.addf %35, %37 : vector<8x128xf32>
    %cst_29 = arith.constant 0.000000e+00 : f32
    %39 = vector.broadcast %cst_29 : f32 to vector<8x128xf32>
    %40 = arith.maximumf %38, %39 : vector<8x128xf32>
    %41 = arith.truncf %40 : vector<8x128xf32> to vector<8x128xbf16>
    %c0_30 = arith.constant 0 : index
    %c0_31 = arith.constant 0 : index
    %42 = vector.load %arg12[%c0_30, %c0_31] : memref<128x128xbf16, #tpu.memory_space<vmem>>, vector<128x128xbf16>
    %cst_32 = arith.constant dense<0.000000e+00> : vector<8x128xf32>
    %43 = tpu.matmul %41, %42, %cst_32 {dimension_numbers = #tpu.dot_dimension_numbers<[1], [0], [0], [1], [0, 0, 1, 1], [], []>} : vector<8x128xbf16>, vector<128x128xbf16>, vector<8x128xf32> -> vector<8x128xf32>
    %c0_33 = arith.constant 0 : index
    %c0_34 = arith.constant 0 : index
    %44 = vector.load %arg13[%c0_33, %c0_34] : memref<1x128xf32, #tpu.memory_space<vmem>>, vector<1x128xf32>
    %45 = vector.broadcast %44 : vector<1x128xf32> to vector<8x128xf32>
    %46 = arith.addf %43, %45 : vector<8x128xf32>
    %cst_35 = arith.constant dense<0xFF800000> : vector<8xf32>
    %47 = vector.multi_reduction <maximumf>, %46, %cst_35 [1] : vector<8x128xf32> to vector<8xf32>
    %48 = vector.shape_cast %47 : vector<8xf32> to vector<8x1xf32>
    %49 = vector.broadcast %48 : vector<8x1xf32> to vector<8x128xf32>
    %50 = arith.subf %46, %49 : vector<8x128xf32>
    %51 = math.exp %50 : vector<8x128xf32>
    %cst_36 = arith.constant dense<0.000000e+00> : vector<8xf32>
    %52 = vector.multi_reduction <add>, %51, %cst_36 [1] : vector<8x128xf32> to vector<8xf32>
    %53 = vector.shape_cast %52 : vector<8xf32> to vector<8x1xf32>
    %54 = math.log %53 : vector<8x1xf32>
    %55 = vector.broadcast %54 : vector<8x1xf32> to vector<8x128xf32>
    %56 = arith.subf %50, %55 : vector<8x128xf32>
    %c0_37 = arith.constant 0 : index
    %c0_38 = arith.constant 0 : index
    %57 = vector.load %arg14[%c0_37, %c0_38] : memref<8x128xf32, #tpu.memory_space<vmem>>, vector<8x128xf32>
    tpu.vector_store %arg14[%c0_37, %c0_38], %56 {strides = array<i32>} : memref<8x128xf32, #tpu.memory_space<vmem>>, vector<8x128xf32>,
    return
  }
  func.func @transform_0(%arg0: i32) -> (i32, i32) {
    %c0_i32 = arith.constant 0 : i32
    %c0_i32_0 = arith.constant 0 : i32
    return %arg0, %c0_i32 : i32, i32
  }
  func.func @transform_1(%arg0: i32) -> (i32, i32) {
    %c0_i32 = arith.constant 0 : i32
    %c0_i32_0 = arith.constant 0 : i32
    %c0_i32_1 = arith.constant 0 : i32
    return %c0_i32, %c0_i32_0 : i32, i32
  }
  func.func @transform_2(%arg0: i32) -> (i32, i32) {
    %c0_i32 = arith.constant 0 : i32
    %c0_i32_0 = arith.constant 0 : i32
    %c0_i32_1 = arith.constant 0 : i32
    return %c0_i32, %c0_i32_0 : i32, i32
  }
  func.func @transform_3(%arg0: i32) -> (i32, i32) {
    %c0_i32 = arith.constant 0 : i32
    %c0_i32_0 = arith.constant 0 : i32
    %c0_i32_1 = arith.constant 0 : i32
    return %c0_i32, %c0_i32_0 : i32, i32
  }
  func.func @transform_4(%arg0: i32) -> (i32, i32) {
    %c0_i32 = arith.constant 0 : i32
    %c0_i32_0 = arith.constant 0 : i32
    %c0_i32_1 = arith.constant 0 : i32
    return %c0_i32, %c0_i32_0 : i32, i32
  }
  func.func @transform_5(%arg0: i32) -> (i32, i32) {
    %c0_i32 = arith.constant 0 : i32
    %c0_i32_0 = arith.constant 0 : i32
    %c0_i32_1 = arith.constant 0 : i32
    return %c0_i32, %c0_i32_0 : i32, i32
  }
  func.func @transform_6(%arg0: i32) -> (i32, i32) {
    %c0_i32 = arith.constant 0 : i32
    %c0_i32_0 = arith.constant 0 : i32
    %c0_i32_1 = arith.constant 0 : i32
    return %c0_i32, %c0_i32_0 : i32, i32
  }
  func.func @transform_7(%arg0: i32) -> (i32, i32) {
    %c0_i32 = arith.constant 0 : i32
    %c0_i32_0 = arith.constant 0 : i32
    %c0_i32_1 = arith.constant 0 : i32
    return %c0_i32, %c0_i32_0 : i32, i32
  }
  func.func @transform_8(%arg0: i32) -> (i32, i32) {
    %c0_i32 = arith.constant 0 : i32
    %c0_i32_0 = arith.constant 0 : i32
    %c0_i32_1 = arith.constant 0 : i32
    return %c0_i32, %c0_i32_0 : i32, i32
  }
  func.func @transform_9(%arg0: i32) -> (i32, i32) {
    %c0_i32 = arith.constant 0 : i32
    %c0_i32_0 = arith.constant 0 : i32
    %c0_i32_1 = arith.constant 0 : i32
    return %c0_i32, %c0_i32_0 : i32, i32
  }
  func.func @transform_10(%arg0: i32) -> (i32, i32) {
    %c0_i32 = arith.constant 0 : i32
    %c0_i32_0 = arith.constant 0 : i32
    %c0_i32_1 = arith.constant 0 : i32
    return %c0_i32, %c0_i32_0 : i32, i32
  }
  func.func @transform_11(%arg0: i32) -> (i32, i32) {
    %c0_i32 = arith.constant 0 : i32
    %c0_i32_0 = arith.constant 0 : i32
    %c0_i32_1 = arith.constant 0 : i32
    return %c0_i32, %c0_i32_0 : i32, i32
  }
  func.func @transform_12(%arg0: i32) -> (i32, i32) {
    %c0_i32 = arith.constant 0 : i32
    %c0_i32_0 = arith.constant 0 : i32
    %c0_i32_1 = arith.constant 0 : i32
    return %c0_i32, %c0_i32_0 : i32, i32
  }
  func.func @transform_13(%arg0: i32) -> (i32, i32) {
    %c0_i32 = arith.constant 0 : i32
    %c0_i32_0 = arith.constant 0 : i32
    return %arg0, %c0_i32 : i32, i32
  }
}

</mosaic_0001>

<llo_original>
// kernel: tpu_custom_call.1
$region0: #{tpu_custom_call.1}
  #allocation0 [shape = 'u32[]', space=smem, size = 0x4, offset = 0x4, fixed_abs, tag = 'smem constant byte address 0x4 - core index']
  #allocation1 [shape = 'u32[144,128]{1,0:T(1,128)}', space=vmem, size = 0x12000, scoped, tag = 'internal scratch']
  %s0 = inlined_call_operand.hbm [shape: f32[8,1024], index: 0, kind: input, shape index: {}]
  %s1 = inlined_call_operand.hbm [shape: bf16[1024,128], index: 1, kind: input, shape index: {}]
  %s2 = inlined_call_operand.vmem [shape: f32[1,128], index: 2, kind: input, shape index: {}]
  %s3 = inlined_call_operand.hbm [shape: bf16[128,128], index: 3, kind: input, shape index: {}]
  %s4 = inlined_call_operand.vmem [shape: f32[1,128], index: 4, kind: input, shape index: {}]
  %s5 = inlined_call_operand.hbm [shape: bf16[128,128], index: 5, kind: input, shape index: {}]
  %s6 = inlined_call_operand.vmem [shape: f32[1,128], index: 6, kind: input, shape index: {}]
  %s7 = inlined_call_operand.hbm [shape: bf16[128,128], index: 7, kind: input, shape index: {}]
  %s8 = inlined_call_operand.vmem [shape: f32[1,128], index: 8, kind: input, shape index: {}]
  %s9 = inlined_call_operand.hbm [shape: bf16[128,128], index: 9, kind: input, shape index: {}]
  %s10 = inlined_call_operand.vmem [shape: f32[1,128], index: 10, kind: input, shape index: {}]
  %s11 = inlined_call_operand.hbm [shape: bf16[128,128], index: 11, kind: input, shape index: {}]
  %s12 = inlined_call_operand.vmem [shape: f32[1,128], index: 12, kind: input, shape index: {}]
  %s13 = inlined_call_operand.hbm [shape: f32[8,128], index: 13, kind: output, shape index: {}]
  %s14 = sld [smem:[#allocation0]]
  $region90: #{tpu_custom_call.1} parent=0
    _
  %s16 = ssub.s32 1, %s14
  %s17 = scalar_select 0, %s16, %s14
  $region1: #{tpu_custom_call.1} parent=0
    #allocation2 [shape = 'u8[32768]{0}', space=vmem, size = 0x8000, scoped, tag = 'input window, operand 0, single buffered']
    #allocation3 [shape = 's32[1]{0}', space=sflag, size = 0x4, scoped, tag = 'scoped memory for tpu_custom_call.1']
    #allocation4 [shape = 's32[1]{0}', space=sflag, size = 0x4, scoped, tag = 'scoped memory for tpu_custom_call.1']
    #allocation5 [shape = 'u8[262144]{0}', space=vmem, size = 0x40000, scoped, tag = 'input window, operand 1, single buffered']
    #allocation6 [shape = 's32[1]{0}', space=sflag, size = 0x4, scoped, tag = 'scoped memory for tpu_custom_call.1']
    #allocation7 [shape = 'u8[32768]{0}', space=vmem, size = 0x8000, scoped, tag = 'input window, operand 3, single buffered']
    #allocation8 [shape = 'u8[32768]{0}', space=vmem, size = 0x8000, scoped, tag = 'input window, operand 5, single buffered']
    #allocation9 [shape = 's32[1]{0}', space=sflag, size = 0x4, scoped, tag = 'scoped memory for tpu_custom_call.1']
    #allocation10 [shape = 'u8[32768]{0}', space=vmem, size = 0x8000, scoped, tag = 'input window, operand 7, single buffered']
    #allocation11 [shape = 'u8[32768]{0}', space=vmem, size = 0x8000, scoped, tag = 'input window, operand 9, single buffered']
    #allocation12 [shape = 's32[1]{0}', space=sflag, size = 0x4, scoped, tag = 'scoped memory for tpu_custom_call.1']
    #allocation13 [shape = 'u8[32768]{0}', space=vmem, size = 0x8000, scoped, tag = 'input window, operand 11, single buffered']
    #allocation14 [shape = 'u8[4096]{0}', space=vmem, size = 0x1000, scoped, tag = 'output window, operand 0, single buffered']
    %18 = vsyncpa [#allocation3], 0
    %19 = vsyncpa [#allocation6], 0
    %20 = vsyncpa [#allocation9], 0
    %21 = vsyncpa [#allocation12], 0
    %22 = vsyncpa [#allocation4], 0
    // Predicated region
    $region2: #{tpu_custom_call.1} parent=1 // pred_check
      _
    $region3: #{tpu_custom_call.1} parent=1 // pred_check_branch
      %24 = sbr.rel (0) target = $region5
    $region4: #{tpu_custom_call.1} parent=1 // pred_region
      %s26 = ssub.s32 1024, 1024
      %27 = vsyncadd [#allocation3], %s26
      %s29 = sshll.u32 [#allocation2], 4
      %s30 = int_to_ptr.vmem [resolvable:$true] %s29
      %32 = dma.hbm_to_vmem [thread:$0]  %s0, 1024, %s30, [#allocation3]
    $region5: #{tpu_custom_call.1} parent=1 // pred_fallthru
      _
    // Predicated region
    $region6: #{tpu_custom_call.1} parent=1 // pred_check
      _
    $region7: #{tpu_custom_call.1} parent=1 // pred_check_branch
      %34 = sbr.rel (0) target = $region9
    $region8: #{tpu_custom_call.1} parent=1 // pred_region
      %s36 = ssub.s32 8192, 8192
      %37 = vsyncadd [#allocation6], %s36
      %s38 = sshll.u32 [#allocation5], 4
      %s39 = int_to_ptr.vmem [resolvable:$true] %s38
      %44 = dma.hbm_to_vmem [thread:$0]  %s1, 8192, %s39, [#allocation6], 64, 64, 4
    $region9: #{tpu_custom_call.1} parent=1 // pred_fallthru
      _
    // Predicated region
    $region10: #{tpu_custom_call.1} parent=1 // pred_check
      _
    $region11: #{tpu_custom_call.1} parent=1 // pred_check_branch
      %46 = sbr.rel (0) target = $region13
    $region12: #{tpu_custom_call.1} parent=1 // pred_region
      _
    $region13: #{tpu_custom_call.1} parent=1 // pred_fallthru
      _
    // Predicated region
    $region14: #{tpu_custom_call.1} parent=1 // pred_check
      _
    $region15: #{tpu_custom_call.1} parent=1 // pred_check_branch
      %48 = sbr.rel (0) target = $region17
    $region16: #{tpu_custom_call.1} parent=1 // pred_region
      %s50 = ssub.s32 1024, 1024
      %51 = vsyncadd [#allocation6], %s50
      %s52 = sshll.u32 [#allocation7], 4
      %s53 = int_to_ptr.vmem [resolvable:$true] %s52
      %58 = dma.hbm_to_vmem [thread:$0]  %s3, 1024, %s53, [#allocation6], 64, 64, 4
    $region17: #{tpu_custom_call.1} parent=1 // pred_fallthru
      _
    // Predicated region
    $region18: #{tpu_custom_call.1} parent=1 // pred_check
      _
    $region19: #{tpu_custom_call.1} parent=1 // pred_check_branch
      %60 = sbr.rel (0) target = $region21
    $region20: #{tpu_custom_call.1} parent=1 // pred_region
      _
    $region21: #{tpu_custom_call.1} parent=1 // pred_fallthru
      _
    // Predicated region
    $region22: #{tpu_custom_call.1} parent=1 // pred_check
      _
    $region23: #{tpu_custom_call.1} parent=1 // pred_check_branch
      %62 = sbr.rel (0) target = $region25
    $region24: #{tpu_custom_call.1} parent=1 // pred_region
      %s64 = ssub.s32 1024, 1024
      %65 = vsyncadd [#allocation9], %s64
      %s66 = sshll.u32 [#allocation8], 4
      %s67 = int_to_ptr.vmem [resolvable:$true] %s66
      %72 = dma.hbm_to_vmem [thread:$0]  %s5, 1024, %s67, [#allocation9], 64, 64, 4
    $region25: #{tpu_custom_call.1} parent=1 // pred_fallthru
      _
    // Predicated region
    $region26: #{tpu_custom_call.1} parent=1 // pred_check
      _
    $region27: #{tpu_custom_call.1} parent=1 // pred_check_branch
      %74 = sbr.rel (0) target = $region29
    $region28: #{tpu_custom_call.1} parent=1 // pred_region
      _
    $region29: #{tpu_custom_call.1} parent=1 // pred_fallthru
      _
    // Predicated region
    $region30: #{tpu_custom_call.1} parent=1 // pred_check
      _
    $region31: #{tpu_custom_call.1} parent=1 // pred_check_branch
      %76 = sbr.rel (0) target = $region33
    $region32: #{tpu_custom_call.1} parent=1 // pred_region
      %s78 = ssub.s32 1024, 1024
      %79 = vsyncadd [#allocation9], %s78
      %s80 = sshll.u32 [#allocation10], 4
      %s81 = int_to_ptr.vmem [resolvable:$true] %s80
      %86 = dma.hbm_to_vmem [thread:$0]  %s7, 1024, %s81, [#allocation9], 64, 64, 4
    $region33: #{tpu_custom_call.1} parent=1 // pred_fallthru
      _
    // Predicated region
    $region34: #{tpu_custom_call.1} parent=1 // pred_check
      _
    $region35: #{tpu_custom_call.1} parent=1 // pred_check_branch
      %88 = sbr.rel (0) target = $region37
    $region36: #{tpu_custom_call.1} parent=1 // pred_region
      _
    $region37: #{tpu_custom_call.1} parent=1 // pred_fallthru
      _
    // Predicated region
    $region38: #{tpu_custom_call.1} parent=1 // pred_check
      _
    $region39: #{tpu_custom_call.1} parent=1 // pred_check_branch
      %90 = sbr.rel (0) target = $region41
    $region40: #{tpu_custom_call.1} parent=1 // pred_region
      %s92 = ssub.s32 1024, 1024
      %93 = vsyncadd [#allocation12], %s92
      %s94 = sshll.u32 [#allocation11], 4
      %s95 = int_to_ptr.vmem [resolvable:$true] %s94
      %100 = dma.hbm_to_vmem [thread:$0]  %s9, 1024, %s95, [#allocation12], 64, 64, 4
    $region41: #{tpu_custom_call.1} parent=1 // pred_fallthru
      _
    // Predicated region
    $region42: #{tpu_custom_call.1} parent=1 // pred_check
      _
    $region43: #{tpu_custom_call.1} parent=1 // pred_check_branch
      %102 = sbr.rel (0) target = $region45
    $region44: #{tpu_custom_call.1} parent=1 // pred_region
      _
    $region45: #{tpu_custom_call.1} parent=1 // pred_fallthru
      _
    // Predicated region
    $region46: #{tpu_custom_call.1} parent=1 // pred_check
      _
    $region47: #{tpu_custom_call.1} parent=1 // pred_check_branch
      %104 = sbr.rel (0) target = $region49
    $region48: #{tpu_custom_call.1} parent=1 // pred_region
      %s106 = ssub.s32 1024, 1024
      %107 = vsyncadd [#allocation12], %s106
      %s108 = sshll.u32 [#allocation13], 4
      %s109 = int_to_ptr.vmem [resolvable:$true] %s108
      %114 = dma.hbm_to_vmem [thread:$0]  %s11, 1024, %s109, [#allocation12], 64, 64, 4
    $region49: #{tpu_custom_call.1} parent=1 // pred_fallthru
      _
    // Predicated region
    $region50: #{tpu_custom_call.1} parent=1 // pred_check
      _
    $region51: #{tpu_custom_call.1} parent=1 // pred_check_branch
      %116 = sbr.rel (0) target = $region53
    $region52: #{tpu_custom_call.1} parent=1 // pred_region
      _
    $region53: #{tpu_custom_call.1} parent=1 // pred_fallthru
      _
    // Predicated region
    $region54: #{tpu_custom_call.1} parent=1 // pred_check
      _
    $region55: #{tpu_custom_call.1} parent=1 // pred_check_branch
      %118 = sbr.rel (0) target = $region57
    $region56: #{tpu_custom_call.1} parent=1 // pred_region
      %119 = dma.done [#allocation3], 1024
    $region57: #{tpu_custom_call.1} parent=1 // pred_fallthru
      _
    // Predicated region
    $region58: #{tpu_custom_call.1} parent=1 // pred_check
      _
    $region59: #{tpu_custom_call.1} parent=1 // pred_check_branch
      %121 = sbr.rel (0) target = $region61
    $region60: #{tpu_custom_call.1} parent=1 // pred_region
      %122 = dma.done [#allocation6], 8192
    $region61: #{tpu_custom_call.1} parent=1 // pred_fallthru
      _
    // Predicated region
    $region62: #{tpu_custom_call.1} parent=1 // pred_check
      _
    $region63: #{tpu_custom_call.1} parent=1 // pred_check_branch
      %124 = sbr.rel (0) target = $region65
    $region64: #{tpu_custom_call.1} parent=1 // pred_region
      %125 = dma.done [#allocation6], 1024
    $region65: #{tpu_custom_call.1} parent=1 // pred_fallthru
      _
    // Predicated region
    $region66: #{tpu_custom_call.1} parent=1 // pred_check
      _
    $region67: #{tpu_custom_call.1} parent=1 // pred_check_branch
      %127 = sbr.rel (0) target = $region69
    $region68: #{tpu_custom_call.1} parent=1 // pred_region
      %128 = dma.done [#allocation9], 1024
    $region69: #{tpu_custom_call.1} parent=1 // pred_fallthru
      _
    // Predicated region
    $region70: #{tpu_custom_call.1} parent=1 // pred_check
      _
    $region71: #{tpu_custom_call.1} parent=1 // pred_check_branch
      %130 = sbr.rel (0) target = $region73
    $region72: #{tpu_custom_call.1} parent=1 // pred_region
      %131 = dma.done [#allocation9], 1024
    $region73: #{tpu_custom_call.1} parent=1 // pred_fallthru
      _
    // Predicated region
    $region74: #{tpu_custom_call.1} parent=1 // pred_check
      _
    $region75: #{tpu_custom_call.1} parent=1 // pred_check_branch
      %133 = sbr.rel (0) target = $region77
    $region76: #{tpu_custom_call.1} parent=1 // pred_region
      %134 = dma.done [#allocation12], 1024
    $region77: #{tpu_custom_call.1} parent=1 // pred_fallthru
      _
    // Predicated region
    $region78: #{tpu_custom_call.1} parent=1 // pred_check
      _
    $region79: #{tpu_custom_call.1} parent=1 // pred_check_branch
      %136 = sbr.rel (0) target = $region81
    $region80: #{tpu_custom_call.1} parent=1 // pred_region
      %137 = dma.done [#allocation12], 1024
    $region81: #{tpu_custom_call.1} parent=1 // pred_fallthru
      _
    %v139 = vld [vmem:[#allocation2] sm:$0xff]
    %v140 = vld [vmem:[#allocation2 + $0x8] sm:$0xff]
    %v141 = vld [vmem:[#allocation2 + $0x10] sm:$0xff]
    %v142 = vld [vmem:[#allocation2 + $0x18] sm:$0xff]
    %v143 = vld [vmem:[#allocation2 + $0x20] sm:$0xff]
    %v144 = vld [vmem:[#allocation2 + $0x28] sm:$0xff]
    %v145 = vld [vmem:[#allocation2 + $0x30] sm:$0xff]
    %v146 = vld [vmem:[#allocation2 + $0x38] sm:$0xff]
    %v147 = vpack.c.bf16 %v139, %v139
    %v148 = vpack.c.bf16 %v140, %v140
    %v149 = vpack.c.bf16 %v141, %v141
    %v150 = vpack.c.bf16 %v142, %v142
    %v151 = vpack.c.bf16 %v143, %v143
    %v152 = vpack.c.bf16 %v144, %v144
    %v153 = vpack.c.bf16 %v145, %v145
    %v154 = vpack.c.bf16 %v146, %v146
    %v155 = vld [vmem:[#allocation5] sm:$0xf]
    %v156 = vld [vmem:[#allocation5 + $0x4] sm:$0xf]
    %v157 = vld [vmem:[#allocation5 + $0x8] sm:$0xf]
    %v158 = vld [vmem:[#allocation5 + $0xc] sm:$0xf]
    %v159 = vld [vmem:[#allocation5 + $0x10] sm:$0xf]
    %v160 = vld [vmem:[#allocation5 + $0x14] sm:$0xf]
    %v161 = vld [vmem:[#allocation5 + $0x18] sm:$0xf]
    %v162 = vld [vmem:[#allocation5 + $0x1c] sm:$0xf]
    %v163 = vld [vmem:[#allocation5 + $0x20] sm:$0xf]
    %v164 = vld [vmem:[#allocation5 + $0x24] sm:$0xf]
    %v165 = vld [vmem:[#allocation5 + $0x28] sm:$0xf]
    %v166 = vld [vmem:[#allocation5 + $0x2c] sm:$0xf]
    %v167 = vld [vmem:[#allocation5 + $0x30] sm:$0xf]
    %v168 = vld [vmem:[#allocation5 + $0x34] sm:$0xf]
    %v169 = vld [vmem:[#allocation5 + $0x38] sm:$0xf]
    %v170 = vld [vmem:[#allocation5 + $0x3c] sm:$0xf]
    %v171 = vld [vmem:[#allocation5 + $0x40] sm:$0xf]
    %v172 = vld [vmem:[#allocation5 + $0x44] sm:$0xf]
    %v173 = vld [vmem:[#allocation5 + $0x48] sm:$0xf]
    %v174 = vld [vmem:[#allocation5 + $0x4c] sm:$0xf]
    %v175 = vld [vmem:[#allocation5 + $0x50] sm:$0xf]
    %v176 = vld [vmem:[#allocation5 + $0x54] sm:$0xf]
    %v177 = vld [vmem:[#allocation5 + $0x58] sm:$0xf]
    %v178 = vld [vmem:[#allocation5 + $0x5c] sm:$0xf]
    %v179 = vld [vmem:[#allocation5 + $0x60] sm:$0xf]
    %v180 = vld [vmem:[#allocation5 + $0x64] sm:$0xf]
    %v181 = vld [vmem:[#allocation5 + $0x68] sm:$0xf]
    %v182 = vld [vmem:[#allocation5 + $0x6c] sm:$0xf]
    %v183 = vld [vmem:[#allocation5 + $0x70] sm:$0xf]
    %v184 = vld [vmem:[#allocation5 + $0x74] sm:$0xf]
    %v185 = vld [vmem:[#allocation5 + $0x78] sm:$0xf]
    %v186 = vld [vmem:[#allocation5 + $0x7c] sm:$0xf]
    %v187 = vld [vmem:[#allocation5 + $0x80] sm:$0xf]
    %v188 = vld [vmem:[#allocation5 + $0x84] sm:$0xf]
    %v189 = vld [vmem:[#allocation5 + $0x88] sm:$0xf]
    %v190 = vld [vmem:[#allocation5 + $0x8c] sm:$0xf]
    %v191 = vld [vmem:[#allocation5 + $0x90] sm:$0xf]
    %v192 = vld [vmem:[#allocation5 + $0x94] sm:$0xf]
    %v193 = vld [vmem:[#allocation5 + $0x98] sm:$0xf]
    %v194 = vld [vmem:[#allocation5 + $0x9c] sm:$0xf]
    %v195 = vld [vmem:[#allocation5 + $0xa0] sm:$0xf]
    %v196 = vld [vmem:[#allocation5 + $0xa4] sm:$0xf]
    %v197 = vld [vmem:[#allocation5 + $0xa8] sm:$0xf]
    %v198 = vld [vmem:[#allocation5 + $0xac] sm:$0xf]
    %v199 = vld [vmem:[#allocation5 + $0xb0] sm:$0xf]
    %v200 = vld [vmem:[#allocation5 + $0xb4] sm:$0xf]
    %v201 = vld [vmem:[#allocation5 + $0xb8] sm:$0xf]
    %v202 = vld [vmem:[#allocation5 + $0xbc] sm:$0xf]
    %v203 = vld [vmem:[#allocation5 + $0xc0] sm:$0xf]
    %v204 = vld [vmem:[#allocation5 + $0xc4] sm:$0xf]
    %v205 = vld [vmem:[#allocation5 + $0xc8] sm:$0xf]
    %v206 = vld [vmem:[#allocation5 + $0xcc] sm:$0xf]
    %v207 = vld [vmem:[#allocation5 + $0xd0] sm:$0xf]
    %v208 = vld [vmem:[#allocation5 + $0xd4] sm:$0xf]
    %v209 = vld [vmem:[#allocation5 + $0xd8] sm:$0xf]
    %v210 = vld [vmem:[#allocation5 + $0xdc] sm:$0xf]
    %v211 = vld [vmem:[#allocation5 + $0xe0] sm:$0xf]
    %v212 = vld [vmem:[#allocation5 + $0xe4] sm:$0xf]
    %v213 = vld [vmem:[#allocation5 + $0xe8] sm:$0xf]
    %v214 = vld [vmem:[#allocation5 + $0xec] sm:$0xf]
    %v215 = vld [vmem:[#allocation5 + $0xf0] sm:$0xf]
    %v216 = vld [vmem:[#allocation5 + $0xf4] sm:$0xf]
    %v217 = vld [vmem:[#allocation5 + $0xf8] sm:$0xf]
    %v218 = vld [vmem:[#allocation5 + $0xfc] sm:$0xf]
    %v219 = vld [vmem:[#allocation5 + $0x100] sm:$0xf]
    %v220 = vld [vmem:[#allocation5 + $0x104] sm:$0xf]
    %v221 = vld [vmem:[#allocation5 + $0x108] sm:$0xf]
    %v222 = vld [vmem:[#allocation5 + $0x10c] sm:$0xf]
    %v223 = vld [vmem:[#allocation5 + $0x110] sm:$0xf]
    %v224 = vld [vmem:[#allocation5 + $0x114] sm:$0xf]
    %v225 = vld [vmem:[#allocation5 + $0x118] sm:$0xf]
    %v226 = vld [vmem:[#allocation5 + $0x11c] sm:$0xf]
    %v227 = vld [vmem:[#allocation5 + $0x120] sm:$0xf]
    %v228 = vld [vmem:[#allocation5 + $0x124] sm:$0xf]
    %v229 = vld [vmem:[#allocation5 + $0x128] sm:$0xf]
    %v230 = vld [vmem:[#allocation5 + $0x12c] sm:$0xf]
    %v231 = vld [vmem:[#allocation5 + $0x130] sm:$0xf]
    %v232 = vld [vmem:[#allocation5 + $0x134] sm:$0xf]
    %v233 = vld [vmem:[#allocation5 + $0x138] sm:$0xf]
    %v234 = vld [vmem:[#allocation5 + $0x13c] sm:$0xf]
    %v235 = vld [vmem:[#allocation5 + $0x140] sm:$0xf]
    %v236 = vld [vmem:[#allocation5 + $0x144] sm:$0xf]
    %v237 = vld [vmem:[#allocation5 + $0x148] sm:$0xf]
    %v238 = vld [vmem:[#allocation5 + $0x14c] sm:$0xf]
    %v239 = vld [vmem:[#allocation5 + $0x150] sm:$0xf]
    %v240 = vld [vmem:[#allocation5 + $0x154] sm:$0xf]
    %v241 = vld [vmem:[#allocation5 + $0x158] sm:$0xf]
    %v242 = vld [vmem:[#allocation5 + $0x15c] sm:$0xf]
    %v243 = vld [vmem:[#allocation5 + $0x160] sm:$0xf]
    %v244 = vld [vmem:[#allocation5 + $0x164] sm:$0xf]
    %v245 = vld [vmem:[#allocation5 + $0x168] sm:$0xf]
    %v246 = vld [vmem:[#allocation5 + $0x16c] sm:$0xf]
    %v247 = vld [vmem:[#allocation5 + $0x170] sm:$0xf]
    %v248 = vld [vmem:[#allocation5 + $0x174] sm:$0xf]
    %v249 = vld [vmem:[#allocation5 + $0x178] sm:$0xf]
    %v250 = vld [vmem:[#allocation5 + $0x17c] sm:$0xf]
    %v251 = vld [vmem:[#allocation5 + $0x180] sm:$0xf]
    %v252 = vld [vmem:[#allocation5 + $0x184] sm:$0xf]
    %v253 = vld [vmem:[#allocation5 + $0x188] sm:$0xf]
    %v254 = vld [vmem:[#allocation5 + $0x18c] sm:$0xf]
    %v255 = vld [vmem:[#allocation5 + $0x190] sm:$0xf]
    %v256 = vld [vmem:[#allocation5 + $0x194] sm:$0xf]
    %v257 = vld [vmem:[#allocation5 + $0x198] sm:$0xf]
    %v258 = vld [vmem:[#allocation5 + $0x19c] sm:$0xf]
    %v259 = vld [vmem:[#allocation5 + $0x1a0] sm:$0xf]
    %v260 = vld [vmem:[#allocation5 + $0x1a4] sm:$0xf]
    %v261 = vld [vmem:[#allocation5 + $0x1a8] sm:$0xf]
    %v262 = vld [vmem:[#allocation5 + $0x1ac] sm:$0xf]
    %v263 = vld [vmem:[#allocation5 + $0x1b0] sm:$0xf]
    %v264 = vld [vmem:[#allocation5 + $0x1b4] sm:$0xf]
    %v265 = vld [vmem:[#allocation5 + $0x1b8] sm:$0xf]
    %v266 = vld [vmem:[#allocation5 + $0x1bc] sm:$0xf]
    %v267 = vld [vmem:[#allocation5 + $0x1c0] sm:$0xf]
    %v268 = vld [vmem:[#allocation5 + $0x1c4] sm:$0xf]
    %v269 = vld [vmem:[#allocation5 + $0x1c8] sm:$0xf]
    %v270 = vld [vmem:[#allocation5 + $0x1cc] sm:$0xf]
    %v271 = vld [vmem:[#allocation5 + $0x1d0] sm:$0xf]
    %v272 = vld [vmem:[#allocation5 + $0x1d4] sm:$0xf]
    %v273 = vld [vmem:[#allocation5 + $0x1d8] sm:$0xf]
    %v274 = vld [vmem:[#allocation5 + $0x1dc] sm:$0xf]
    %v275 = vld [vmem:[#allocation5 + $0x1e0] sm:$0xf]
    %v276 = vld [vmem:[#allocation5 + $0x1e4] sm:$0xf]
    %v277 = vld [vmem:[#allocation5 + $0x1e8] sm:$0xf]
    %v278 = vld [vmem:[#allocation5 + $0x1ec] sm:$0xf]
    %v279 = vld [vmem:[#allocation5 + $0x1f0] sm:$0xf]
    %v280 = vld [vmem:[#allocation5 + $0x1f4] sm:$0xf]
    %v281 = vld [vmem:[#allocation5 + $0x1f8] sm:$0xf]
    %v282 = vld [vmem:[#allocation5 + $0x1fc] sm:$0xf]
    %v283 = vld [vmem:[%s2] sm:$0x1]
    %v285 = vlaneseq
    %v286 = vshrl.u32 %v285, 7
    %v287 = vsub.s32 0, %v286
    %v288 = vrot.slane %v283, %v287
    %v418 = vunpack.c.l.b16 %v155
    %v419 = vunpack.c.l.b16 %v156
    %v420 = vunpack.c.l.b16 %v157
    %v421 = vunpack.c.l.b16 %v158
    %v422 = vunpack.c.l.b16 %v159
    %v423 = vunpack.c.l.b16 %v160
    %v424 = vunpack.c.l.b16 %v161
    %v425 = vunpack.c.l.b16 %v162
    %v426 = vunpack.c.l.b16 %v163
    %v427 = vunpack.c.l.b16 %v164
    %v428 = vunpack.c.l.b16 %v165
    %v429 = vunpack.c.l.b16 %v166
    %v430 = vunpack.c.l.b16 %v167
    %v431 = vunpack.c.l.b16 %v168
    %v432 = vunpack.c.l.b16 %v169
    %v433 = vunpack.c.l.b16 %v170
    %v434 = vunpack.c.l.b16 %v171
    %v435 = vunpack.c.l.b16 %v172
    %v436 = vunpack.c.l.b16 %v173
    %v437 = vunpack.c.l.b16 %v174
    %v438 = vunpack.c.l.b16 %v175
    %v439 = vunpack.c.l.b16 %v176
    %v440 = vunpack.c.l.b16 %v177
    %v441 = vunpack.c.l.b16 %v178
    %v442 = vunpack.c.l.b16 %v179
    %v443 = vunpack.c.l.b16 %v180
    %v444 = vunpack.c.l.b16 %v181
    %v445 = vunpack.c.l.b16 %v182
    %v446 = vunpack.c.l.b16 %v183
    %v447 = vunpack.c.l.b16 %v184
    %v448 = vunpack.c.l.b16 %v185
    %v449 = vunpack.c.l.b16 %v186
    %v450 = vunpack.c.l.b16 %v187
    %v451 = vunpack.c.l.b16 %v188
    %v452 = vunpack.c.l.b16 %v189
    %v453 = vunpack.c.l.b16 %v190
    %v454 = vunpack.c.l.b16 %v191
    %v455 = vunpack.c.l.b16 %v192
    %v456 = vunpack.c.l.b16 %v193
    %v457 = vunpack.c.l.b16 %v194
    %v458 = vunpack.c.l.b16 %v195
    %v459 = vunpack.c.l.b16 %v196
    %v460 = vunpack.c.l.b16 %v197
    %v461 = vunpack.c.l.b16 %v198
    %v462 = vunpack.c.l.b16 %v199
    %v463 = vunpack.c.l.b16 %v200
    %v464 = vunpack.c.l.b16 %v201
    %v465 = vunpack.c.l.b16 %v202
    %v466 = vunpack.c.l.b16 %v203
    %v467 = vunpack.c.l.b16 %v204
    %v468 = vunpack.c.l.b16 %v205
    %v469 = vunpack.c.l.b16 %v206
    %v470 = vunpack.c.l.b16 %v207
    %v471 = vunpack.c.l.b16 %v208
    %v472 = vunpack.c.l.b16 %v209
    %v473 = vunpack.c.l.b16 %v210
    %v474 = vunpack.c.l.b16 %v211
    %v475 = vunpack.c.l.b16 %v212
    %v476 = vunpack.c.l.b16 %v213
    %v477 = vunpack.c.l.b16 %v214
    %v478 = vunpack.c.l.b16 %v215
    %v479 = vunpack.c.l.b16 %v216
    %v480 = vunpack.c.l.b16 %v217
    %v481 = vunpack.c.l.b16 %v218
    %v482 = vunpack.c.l.b16 %v219
    %v483 = vunpack.c.l.b16 %v220
    %v484 = vunpack.c.l.b16 %v221
    %v485 = vunpack.c.l.b16 %v222
    %v486 = vunpack.c.l.b16 %v223
    %v487 = vunpack.c.l.b16 %v224
    %v488 = vunpack.c.l.b16 %v225
    %v489 = vunpack.c.l.b16 %v226
    %v490 = vunpack.c.l.b16 %v227
    %v491 = vunpack.c.l.b16 %v228
    %v492 = vunpack.c.l.b16 %v229
    %v493 = vunpack.c.l.b16 %v230
    %v494 = vunpack.c.l.b16 %v231
    %v495 = vunpack.c.l.b16 %v232
    %v496 = vunpack.c.l.b16 %v233
    %v497 = vunpack.c.l.b16 %v234
    %v498 = vunpack.c.l.b16 %v235
    %v499 = vunpack.c.l.b16 %v236
    %v500 = vunpack.c.l.b16 %v237
    %v501 = vunpack.c.l.b16 %v238
    %v502 = vunpack.c.l.b16 %v239
    %v503 = vunpack.c.l.b16 %v240
    %v504 = vunpack.c.l.b16 %v241
    %v505 = vunpack.c.l.b16 %v242
    %v506 = vunpack.c.l.b16 %v243
    %v507 = vunpack.c.l.b16 %v244
    %v508 = vunpack.c.l.b16 %v245
    %v509 = vunpack.c.l.b16 %v246
    %v510 = vunpack.c.l.b16 %v247
    %v511 = vunpack.c.l.b16 %v248
    %v512 = vunpack.c.l.b16 %v249
    %v513 = vunpack.c.l.b16 %v250
    %v514 = vunpack.c.l.b16 %v251
    %v515 = vunpack.c.l.b16 %v252
    %v516 = vunpack.c.l.b16 %v253
    %v517 = vunpack.c.l.b16 %v254
    %v518 = vunpack.c.l.b16 %v255
    %v519 = vunpack.c.l.b16 %v256
    %v520 = vunpack.c.l.b16 %v257
    %v521 = vunpack.c.l.b16 %v258
    %v522 = vunpack.c.l.b16 %v259
    %v523 = vunpack.c.l.b16 %v260
    %v524 = vunpack.c.l.b16 %v261
    %v525 = vunpack.c.l.b16 %v262
    %v526 = vunpack.c.l.b16 %v263
    %v527 = vunpack.c.l.b16 %v264
    %v528 = vunpack.c.l.b16 %v265
    %v529 = vunpack.c.l.b16 %v266
    %v530 = vunpack.c.l.b16 %v267
    %v531 = vunpack.c.l.b16 %v268
    %v532 = vunpack.c.l.b16 %v269
    %v533 = vunpack.c.l.b16 %v270
    %v534 = vunpack.c.l.b16 %v271
    %v535 = vunpack.c.l.b16 %v272
    %v536 = vunpack.c.l.b16 %v273
    %v537 = vunpack.c.l.b16 %v274
    %v538 = vunpack.c.l.b16 %v275
    %v539 = vunpack.c.l.b16 %v276
    %v540 = vunpack.c.l.b16 %v277
    %v541 = vunpack.c.l.b16 %v278
    %v542 = vunpack.c.l.b16 %v279
    %v543 = vunpack.c.l.b16 %v280
    %v544 = vunpack.c.l.b16 %v281
    %v545 = vunpack.c.l.b16 %v282
    %v546 = vpack.c.b16 %v419, %v418
    %v547 = vpack.c.b16 %v421, %v420
    %v548 = vpack.c.b16 %v423, %v422
    %v549 = vpack.c.b16 %v425, %v424
    %v550 = vpack.c.b16 %v427, %v426
    %v551 = vpack.c.b16 %v429, %v428
    %v552 = vpack.c.b16 %v431, %v430
    %v553 = vpack.c.b16 %v433, %v432
    %v554 = vpack.c.b16 %v435, %v434
    %v555 = vpack.c.b16 %v437, %v436
    %v556 = vpack.c.b16 %v439, %v438
    %v557 = vpack.c.b16 %v441, %v440
    %v558 = vpack.c.b16 %v443, %v442
    %v559 = vpack.c.b16 %v445, %v444
    %v560 = vpack.c.b16 %v447, %v446
    %v561 = vpack.c.b16 %v449, %v448
    %v562 = vpack.c.b16 %v451, %v450
    %v563 = vpack.c.b16 %v453, %v452
    %v564 = vpack.c.b16 %v455, %v454
    %v565 = vpack.c.b16 %v457, %v456
    %v566 = vpack.c.b16 %v459, %v458
    %v567 = vpack.c.b16 %v461, %v460
    %v568 = vpack.c.b16 %v463, %v462
    %v569 = vpack.c.b16 %v465, %v464
    %v570 = vpack.c.b16 %v467, %v466
    %v571 = vpack.c.b16 %v469, %v468
    %v572 = vpack.c.b16 %v471, %v470
    %v573 = vpack.c.b16 %v473, %v472
    %v574 = vpack.c.b16 %v475, %v474
    %v575 = vpack.c.b16 %v477, %v476
    %v576 = vpack.c.b16 %v479, %v478
    %v577 = vpack.c.b16 %v481, %v480
    %v578 = vpack.c.b16 %v483, %v482
    %v579 = vpack.c.b16 %v485, %v484
    %v580 = vpack.c.b16 %v487, %v486
    %v581 = vpack.c.b16 %v489, %v488
    %v582 = vpack.c.b16 %v491, %v490
    %v583 = vpack.c.b16 %v493, %v492
    %v584 = vpack.c.b16 %v495, %v494
    %v585 = vpack.c.b16 %v497, %v496
    %v586 = vpack.c.b16 %v499, %v498
    %v587 = vpack.c.b16 %v501, %v500
    %v588 = vpack.c.b16 %v503, %v502
    %v589 = vpack.c.b16 %v505, %v504
    %v590 = vpack.c.b16 %v507, %v506
    %v591 = vpack.c.b16 %v509, %v508
    %v592 = vpack.c.b16 %v511, %v510
    %v593 = vpack.c.b16 %v513, %v512
    %v594 = vpack.c.b16 %v515, %v514
    %v595 = vpack.c.b16 %v517, %v516
    %v596 = vpack.c.b16 %v519, %v518
    %v597 = vpack.c.b16 %v521, %v520
    %v598 = vpack.c.b16 %v523, %v522
    %v599 = vpack.c.b16 %v525, %v524
    %v600 = vpack.c.b16 %v527, %v526
    %v601 = vpack.c.b16 %v529, %v528
    %v602 = vpack.c.b16 %v531, %v530
    %v603 = vpack.c.b16 %v533, %v532
    %v604 = vpack.c.b16 %v535, %v534
    %v605 = vpack.c.b16 %v537, %v536
    %v606 = vpack.c.b16 %v539, %v538
    %v607 = vpack.c.b16 %v541, %v540
    %v608 = vpack.c.b16 %v543, %v542
    %v609 = vpack.c.b16 %v545, %v544
    %674 = vmatprep.subr.bf16.mxu0 0
    %675 = vmatpush1.bf16.msra.mxu0 %v546
    %676 = vmatprep.subr.bf16.mxu0 0
    %677 = vmatpush1.bf16.msra.mxu0 %v547
    %678 = vmatprep.subr.bf16.mxu0 0
    %679 = vmatpush1.bf16.msra.mxu0 %v548
    %680 = vmatprep.subr.bf16.mxu0 0
    %681 = vmatpush1.bf16.msra.mxu0 %v549
    %682 = vmatprep.subr.bf16.mxu0 0
    %683 = vmatpush1.bf16.msra.mxu0 %v550
    %684 = vmatprep.subr.bf16.mxu0 0
    %685 = vmatpush1.bf16.msra.mxu0 %v551
    %686 = vmatprep.subr.bf16.mxu0 0
    %687 = vmatpush1.bf16.msra.mxu0 %v552
    %688 = vmatprep.subr.bf16.mxu0 0
    %689 = vmatpush1.bf16.msra.mxu0 %v553
    %690 = vmatprep.subr.bf16.mxu0 0
    %691 = vmatpush1.bf16.msra.mxu0 %v554
    %692 = vmatprep.subr.bf16.mxu0 0
    %693 = vmatpush1.bf16.msra.mxu0 %v555
    %694 = vmatprep.subr.bf16.mxu0 0
    %695 = vmatpush1.bf16.msra.mxu0 %v556
    %696 = vmatprep.subr.bf16.mxu0 0
    %697 = vmatpush1.bf16.msra.mxu0 %v557
    %698 = vmatprep.subr.bf16.mxu0 0
    %699 = vmatpush1.bf16.msra.mxu0 %v558
    %700 = vmatprep.subr.bf16.mxu0 0
    %701 = vmatpush1.bf16.msra.mxu0 %v559
    %702 = vmatprep.subr.bf16.mxu0 0
    %703 = vmatpush1.bf16.msra.mxu0 %v560
    %704 = vmatprep.subr.bf16.mxu0 0
    %705 = vmatpush1.bf16.msra.mxu0 %v561
    %706 = vmatprep.mubr.bf16.mxu0 %v148
    %707 = vmatmul.mubr.bf16.gmra.mrb[0].mxu0 %v147
    %v708 = vpop.f32.mrb[0].mxu0
    %v709 = vadd.f32 %v288, %v708
    %v710 = vpop.f32.mrb[0].mxu0
    %v711 = vpop.f32.mrb[0].mxu0
    %v712 = vpop.f32.mrb[0].mxu0
    %713 = vdwg.mxu0
    %714 = vmatprep.subr.bf16.mxu0 0
    %715 = vmatpush1.bf16.msra.mxu0 %v562
    %716 = vmatprep.subr.bf16.mxu0 0
    %717 = vmatpush1.bf16.msra.mxu0 %v563
    %718 = vmatprep.subr.bf16.mxu0 0
    %719 = vmatpush1.bf16.msra.mxu0 %v564
    %720 = vmatprep.subr.bf16.mxu0 0
    %721 = vmatpush1.bf16.msra.mxu0 %v565
    %722 = vmatprep.subr.bf16.mxu0 0
    %723 = vmatpush1.bf16.msra.mxu0 %v566
    %724 = vmatprep.subr.bf16.mxu0 0
    %725 = vmatpush1.bf16.msra.mxu0 %v567
    %726 = vmatprep.subr.bf16.mxu0 0
    %727 = vmatpush1.bf16.msra.mxu0 %v568
    %728 = vmatprep.subr.bf16.mxu0 0
    %729 = vmatpush1.bf16.msra.mxu0 %v569
    %730 = vmatprep.subr.bf16.mxu0 0
    %731 = vmatpush1.bf16.msra.mxu0 %v570
    %732 = vmatprep.subr.bf16.mxu0 0
    %733 = vmatpush1.bf16.msra.mxu0 %v571
    %734 = vmatprep.subr.bf16.mxu0 0
    %735 = vmatpush1.bf16.msra.mxu0 %v572
    %736 = vmatprep.subr.bf16.mxu0 0
    %737 = vmatpush1.bf16.msra.mxu0 %v573
    %738 = vmatprep.subr.bf16.mxu0 0
    %739 = vmatpush1.bf16.msra.mxu0 %v574
    %740 = vmatprep.subr.bf16.mxu0 0
    %741 = vmatpush1.bf16.msra.mxu0 %v575
    %742 = vmatprep.subr.bf16.mxu0 0
    %743 = vmatpush1.bf16.msra.mxu0 %v576
    %744 = vmatprep.subr.bf16.mxu0 0
    %745 = vmatpush1.bf16.msra.mxu0 %v577
    %746 = vmatprep.mubr.bf16.mxu0 %v150
    %747 = vmatmul.mubr.bf16.gmra.mrb[0].mxu0 %v149
    %v748 = vpop.f32.mrb[0].mxu0
    %v749 = vadd.f32 %v709, %v748
    %v750 = vpop.f32.mrb[0].mxu0
    %v751 = vpop.f32.mrb[0].mxu0
    %v752 = vpop.f32.mrb[0].mxu0
    %753 = vdwg.mxu0
    %754 = vmatprep.subr.bf16.mxu0 0
    %755 = vmatpush1.bf16.msra.mxu0 %v578
    %756 = vmatprep.subr.bf16.mxu0 0
    %757 = vmatpush1.bf16.msra.mxu0 %v579
    %758 = vmatprep.subr.bf16.mxu0 0
    %759 = vmatpush1.bf16.msra.mxu0 %v580
    %760 = vmatprep.subr.bf16.mxu0 0
    %761 = vmatpush1.bf16.msra.mxu0 %v581
    %762 = vmatprep.subr.bf16.mxu0 0
    %763 = vmatpush1.bf16.msra.mxu0 %v582
    %764 = vmatprep.subr.bf16.mxu0 0
    %765 = vmatpush1.bf16.msra.mxu0 %v583
    %766 = vmatprep.subr.bf16.mxu0 0
    %767 = vmatpush1.bf16.msra.mxu0 %v584
    %768 = vmatprep.subr.bf16.mxu0 0
    %769 = vmatpush1.bf16.msra.mxu0 %v585
    %770 = vmatprep.subr.bf16.mxu0 0
    %771 = vmatpush1.bf16.msra.mxu0 %v586
    %772 = vmatprep.subr.bf16.mxu0 0
    %773 = vmatpush1.bf16.msra.mxu0 %v587
    %774 = vmatprep.subr.bf16.mxu0 0
    %775 = vmatpush1.bf16.msra.mxu0 %v588
    %776 = vmatprep.subr.bf16.mxu0 0
    %777 = vmatpush1.bf16.msra.mxu0 %v589
    %778 = vmatprep.subr.bf16.mxu0 0
    %779 = vmatpush1.bf16.msra.mxu0 %v590
    %780 = vmatprep.subr.bf16.mxu0 0
    %781 = vmatpush1.bf16.msra.mxu0 %v591
    %782 = vmatprep.subr.bf16.mxu0 0
    %783 = vmatpush1.bf16.msra.mxu0 %v592
    %784 = vmatprep.subr.bf16.mxu0 0
    %785 = vmatpush1.bf16.msra.mxu0 %v593
    %786 = vmatprep.mubr.bf16.mxu0 %v152
    %787 = vmatmul.mubr.bf16.gmra.mrb[0].mxu0 %v151
    %v788 = vpop.f32.mrb[0].mxu0
    %v789 = vadd.f32 %v749, %v788
    %v790 = vpop.f32.mrb[0].mxu0
    %v791 = vpop.f32.mrb[0].mxu0
    %v792 = vpop.f32.mrb[0].mxu0
    %793 = vdwg.mxu0
    %794 = vmatprep.subr.bf16.mxu0 0
    %795 = vmatpush1.bf16.msra.mxu0 %v594
    %796 = vmatprep.subr.bf16.mxu0 0
    %797 = vmatpush1.bf16.msra.mxu0 %v595
    %798 = vmatprep.subr.bf16.mxu0 0
    %799 = vmatpush1.bf16.msra.mxu0 %v596
    %800 = vmatprep.subr.bf16.mxu0 0
    %801 = vmatpush1.bf16.msra.mxu0 %v597
    %802 = vmatprep.subr.bf16.mxu0 0
    %803 = vmatpush1.bf16.msra.mxu0 %v598
    %804 = vmatprep.subr.bf16.mxu0 0
    %805 = vmatpush1.bf16.msra.mxu0 %v599
    %806 = vmatprep.subr.bf16.mxu0 0
    %807 = vmatpush1.bf16.msra.mxu0 %v600
    %808 = vmatprep.subr.bf16.mxu0 0
    %809 = vmatpush1.bf16.msra.mxu0 %v601
    %810 = vmatprep.subr.bf16.mxu0 0
    %811 = vmatpush1.bf16.msra.mxu0 %v602
    %812 = vmatprep.subr.bf16.mxu0 0
    %813 = vmatpush1.bf16.msra.mxu0 %v603
    %814 = vmatprep.subr.bf16.mxu0 0
    %815 = vmatpush1.bf16.msra.mxu0 %v604
    %816 = vmatprep.subr.bf16.mxu0 0
    %817 = vmatpush1.bf16.msra.mxu0 %v605
    %818 = vmatprep.subr.bf16.mxu0 0
    %819 = vmatpush1.bf16.msra.mxu0 %v606
    %820 = vmatprep.subr.bf16.mxu0 0
    %821 = vmatpush1.bf16.msra.mxu0 %v607
    %822 = vmatprep.subr.bf16.mxu0 0
    %823 = vmatpush1.bf16.msra.mxu0 %v608
    %824 = vmatprep.subr.bf16.mxu0 0
    %825 = vmatpush1.bf16.msra.mxu0 %v609
    %826 = vmatprep.mubr.bf16.mxu0 %v154
    %827 = vmatmul.mubr.bf16.gmra.mrb[0].mxu0 %v153
    %v828 = vpop.f32.mrb[0].mxu0
    %v829 = vadd.f32 %v789, %v828
    %v830 = vpop.f32.mrb[0].mxu0
    %v831 = vpop.f32.mrb[0].mxu0
    %v832 = vpop.f32.mrb[0].mxu0
    %833 = vdwg.mxu0
    %v834 = vmax.f32 %v829, 0.0
    %v835 = vpack.c.bf16 %v834, %v834
    %v836 = vld [vmem:[#allocation7] sm:$0xf]
    %v837 = vld [vmem:[#allocation7 + $0x4] sm:$0xf]
    %v838 = vld [vmem:[#allocation7 + $0x8] sm:$0xf]
    %v839 = vld [vmem:[#allocation7 + $0xc] sm:$0xf]
    %v840 = vld [vmem:[#allocation7 + $0x10] sm:$0xf]
    %v841 = vld [vmem:[#allocation7 + $0x14] sm:$0xf]
    %v842 = vld [vmem:[#allocation7 + $0x18] sm:$0xf]
    %v843 = vld [vmem:[#allocation7 + $0x1c] sm:$0xf]
    %v844 = vld [vmem:[#allocation7 + $0x20] sm:$0xf]
    %v845 = vld [vmem:[#allocation7 + $0x24] sm:$0xf]
    %v846 = vld [vmem:[#allocation7 + $0x28] sm:$0xf]
    %v847 = vld [vmem:[#allocation7 + $0x2c] sm:$0xf]
    %v848 = vld [vmem:[#allocation7 + $0x30] sm:$0xf]
    %v849 = vld [vmem:[#allocation7 + $0x34] sm:$0xf]
    %v850 = vld [vmem:[#allocation7 + $0x38] sm:$0xf]
    %v851 = vld [vmem:[#allocation7 + $0x3c] sm:$0xf]
    %v852 = vld [vmem:[%s4] sm:$0x1]
    %v854 = vlaneseq
    %v855 = vshrl.u32 %v854, 7
    %v856 = vsub.s32 0, %v855
    %v857 = vrot.slane %v852, %v856
    %v875 = vunpack.c.l.b16 %v836
    %v876 = vunpack.c.l.b16 %v837
    %v877 = vunpack.c.l.b16 %v838
    %v878 = vunpack.c.l.b16 %v839
    %v879 = vunpack.c.l.b16 %v840
    %v880 = vunpack.c.l.b16 %v841
    %v881 = vunpack.c.l.b16 %v842
    %v882 = vunpack.c.l.b16 %v843
    %v883 = vunpack.c.l.b16 %v844
    %v884 = vunpack.c.l.b16 %v845
    %v885 = vunpack.c.l.b16 %v846
    %v886 = vunpack.c.l.b16 %v847
    %v887 = vunpack.c.l.b16 %v848
    %v888 = vunpack.c.l.b16 %v849
    %v889 = vunpack.c.l.b16 %v850
    %v890 = vunpack.c.l.b16 %v851
    %v891 = vpack.c.b16 %v876, %v875
    %v892 = vpack.c.b16 %v878, %v877
    %v893 = vpack.c.b16 %v880, %v879
    %v894 = vpack.c.b16 %v882, %v881
    %v895 = vpack.c.b16 %v884, %v883
    %v896 = vpack.c.b16 %v886, %v885
    %v897 = vpack.c.b16 %v888, %v887
    %v898 = vpack.c.b16 %v890, %v889
    %907 = vmatprep.subr.bf16.mxu0 0
    %908 = vmatpush1.bf16.msra.mxu0 %v891
    %909 = vmatprep.subr.bf16.mxu0 0
    %910 = vmatpush1.bf16.msra.mxu0 %v892
    %911 = vmatprep.subr.bf16.mxu0 0
    %912 = vmatpush1.bf16.msra.mxu0 %v893
    %913 = vmatprep.subr.bf16.mxu0 0
    %914 = vmatpush1.bf16.msra.mxu0 %v894
    %915 = vmatprep.subr.bf16.mxu0 0
    %916 = vmatpush1.bf16.msra.mxu0 %v895
    %917 = vmatprep.subr.bf16.mxu0 0
    %918 = vmatpush1.bf16.msra.mxu0 %v896
    %919 = vmatprep.subr.bf16.mxu0 0
    %920 = vmatpush1.bf16.msra.mxu0 %v897
    %921 = vmatprep.subr.bf16.mxu0 0
    %922 = vmatpush1.bf16.msra.mxu0 %v898
    %923 = vmatprep.subr.bf16.mxu0 0
    %924 = vmatpush1.bf16.msra.mxu0 0
    %925 = vmatprep.subr.bf16.mxu0 0
    %926 = vmatpush1.bf16.msra.mxu0 0
    %927 = vmatprep.subr.bf16.mxu0 0
    %928 = vmatpush1.bf16.msra.mxu0 0
    %929 = vmatprep.subr.bf16.mxu0 0
    %930 = vmatpush1.bf16.msra.mxu0 0
    %931 = vmatprep.subr.bf16.mxu0 0
    %932 = vmatpush1.bf16.msra.mxu0 0
    %933 = vmatprep.subr.bf16.mxu0 0
    %934 = vmatpush1.bf16.msra.mxu0 0
    %935 = vmatprep.subr.bf16.mxu0 0
    %936 = vmatpush1.bf16.msra.mxu0 0
    %937 = vmatprep.subr.bf16.mxu0 0
    %938 = vmatpush1.bf16.msra.mxu0 0
    %939 = vmatprep.mubr.bf16.mxu0 0
    %940 = vmatmul.mubr.bf16.gmra.mrb[0].mxu0 %v835
    %v941 = vpop.f32.mrb[0].mxu0
    %v942 = vadd.f32 %v857, %v941
    %v943 = vpop.f32.mrb[0].mxu0
    %v944 = vpop.f32.mrb[0].mxu0
    %v945 = vpop.f32.mrb[0].mxu0
    %946 = vdwg.mxu0
    %v947 = vmax.f32 %v942, 0.0
    %v948 = vpack.c.bf16 %v947, %v947
    %v949 = vld [vmem:[#allocation8] sm:$0xf]
    %v950 = vld [vmem:[#allocation8 + $0x4] sm:$0xf]
    %v951 = vld [vmem:[#allocation8 + $0x8] sm:$0xf]
    %v952 = vld [vmem:[#allocation8 + $0xc] sm:$0xf]
    %v953 = vld [vmem:[#allocation8 + $0x10] sm:$0xf]
    %v954 = vld [vmem:[#allocation8 + $0x14] sm:$0xf]
    %v955 = vld [vmem:[#allocation8 + $0x18] sm:$0xf]
    %v956 = vld [vmem:[#allocation8 + $0x1c] sm:$0xf]
    %v957 = vld [vmem:[#allocation8 + $0x20] sm:$0xf]
    %v958 = vld [vmem:[#allocation8 + $0x24] sm:$0xf]
    %v959 = vld [vmem:[#allocation8 + $0x28] sm:$0xf]
    %v960 = vld [vmem:[#allocation8 + $0x2c] sm:$0xf]
    %v961 = vld [vmem:[#allocation8 + $0x30] sm:$0xf]
    %v962 = vld [vmem:[#allocation8 + $0x34] sm:$0xf]
    %v963 = vld [vmem:[#allocation8 + $0x38] sm:$0xf]
    %v964 = vld [vmem:[#allocation8 + $0x3c] sm:$0xf]
    %v965 = vld [vmem:[%s6] sm:$0x1]
    %v967 = vlaneseq
    %v968 = vshrl.u32 %v967, 7
    %v969 = vsub.s32 0, %v968
    %v970 = vrot.slane %v965, %v969
    %v988 = vunpack.c.l.b16 %v949
    %v989 = vunpack.c.l.b16 %v950
    %v990 = vunpack.c.l.b16 %v951
    %v991 = vunpack.c.l.b16 %v952
    %v992 = vunpack.c.l.b16 %v953
    %v993 = vunpack.c.l.b16 %v954
    %v994 = vunpack.c.l.b16 %v955
    %v995 = vunpack.c.l.b16 %v956
    %v996 = vunpack.c.l.b16 %v957
    %v997 = vunpack.c.l.b16 %v958
    %v998 = vunpack.c.l.b16 %v959
    %v999 = vunpack.c.l.b16 %v960
    %v1000 = vunpack.c.l.b16 %v961
    %v1001 = vunpack.c.l.b16 %v962
    %v1002 = vunpack.c.l.b16 %v963
    %v1003 = vunpack.c.l.b16 %v964
    %v1004 = vpack.c.b16 %v989, %v988
    %v1005 = vpack.c.b16 %v991, %v990
    %v1006 = vpack.c.b16 %v993, %v992
    %v1007 = vpack.c.b16 %v995, %v994
    %v1008 = vpack.c.b16 %v997, %v996
    %v1009 = vpack.c.b16 %v999, %v998
    %v1010 = vpack.c.b16 %v1001, %v1000
    %v1011 = vpack.c.b16 %v1003, %v1002
    %1020 = vmatprep.subr.bf16.mxu0 0
    %1021 = vmatpush1.bf16.msra.mxu0 %v1004
    %1022 = vmatprep.subr.bf16.mxu0 0
    %1023 = vmatpush1.bf16.msra.mxu0 %v1005
    %1024 = vmatprep.subr.bf16.mxu0 0
    %1025 = vmatpush1.bf16.msra.mxu0 %v1006
    %1026 = vmatprep.subr.bf16.mxu0 0
    %1027 = vmatpush1.bf16.msra.mxu0 %v1007
    %1028 = vmatprep.subr.bf16.mxu0 0
    %1029 = vmatpush1.bf16.msra.mxu0 %v1008
    %1030 = vmatprep.subr.bf16.mxu0 0
    %1031 = vmatpush1.bf16.msra.mxu0 %v1009
    %1032 = vmatprep.subr.bf16.mxu0 0
    %1033 = vmatpush1.bf16.msra.mxu0 %v1010
    %1034 = vmatprep.subr.bf16.mxu0 0
    %1035 = vmatpush1.bf16.msra.mxu0 %v1011
    %1036 = vmatprep.subr.bf16.mxu0 0
    %1037 = vmatpush1.bf16.msra.mxu0 0
    %1038 = vmatprep.subr.bf16.mxu0 0
    %1039 = vmatpush1.bf16.msra.mxu0 0
    %1040 = vmatprep.subr.bf16.mxu0 0
    %1041 = vmatpush1.bf16.msra.mxu0 0
    %1042 = vmatprep.subr.bf16.mxu0 0
    %1043 = vmatpush1.bf16.msra.mxu0 0
    %1044 = vmatprep.subr.bf16.mxu0 0
    %1045 = vmatpush1.bf16.msra.mxu0 0
    %1046 = vmatprep.subr.bf16.mxu0 0
    %1047 = vmatpush1.bf16.msra.mxu0 0
    %1048 = vmatprep.subr.bf16.mxu0 0
    %1049 = vmatpush1.bf16.msra.mxu0 0
    %1050 = vmatprep.subr.bf16.mxu0 0
    %1051 = vmatpush1.bf16.msra.mxu0 0
    %1052 = vmatprep.mubr.bf16.mxu0 0
    %1053 = vmatmul.mubr.bf16.gmra.mrb[0].mxu0 %v948
    %v1054 = vpop.f32.mrb[0].mxu0
    %v1055 = vadd.f32 %v970, %v1054
    %v1056 = vpop.f32.mrb[0].mxu0
    %v1057 = vpop.f32.mrb[0].mxu0
    %v1058 = vpop.f32.mrb[0].mxu0
    %1059 = vdwg.mxu0
    %v1060 = vmax.f32 %v1055, 0.0
    %v1061 = vpack.c.bf16 %v1060, %v1060
    %v1062 = vld [vmem:[#allocation10] sm:$0xf]
    %v1063 = vld [vmem:[#allocation10 + $0x4] sm:$0xf]
    %v1064 = vld [vmem:[#allocation10 + $0x8] sm:$0xf]
    %v1065 = vld [vmem:[#allocation10 + $0xc] sm:$0xf]
    %v1066 = vld [vmem:[#allocation10 + $0x10] sm:$0xf]
    %v1067 = vld [vmem:[#allocation10 + $0x14] sm:$0xf]
    %v1068 = vld [vmem:[#allocation10 + $0x18] sm:$0xf]
    %v1069 = vld [vmem:[#allocation10 + $0x1c] sm:$0xf]
    %v1070 = vld [vmem:[#allocation10 + $0x20] sm:$0xf]
    %v1071 = vld [vmem:[#allocation10 + $0x24] sm:$0xf]
    %v1072 = vld [vmem:[#allocation10 + $0x28] sm:$0xf]
    %v1073 = vld [vmem:[#allocation10 + $0x2c] sm:$0xf]
    %v1074 = vld [vmem:[#allocation10 + $0x30] sm:$0xf]
    %v1075 = vld [vmem:[#allocation10 + $0x34] sm:$0xf]
    %v1076 = vld [vmem:[#allocation10 + $0x38] sm:$0xf]
    %v1077 = vld [vmem:[#allocation10 + $0x3c] sm:$0xf]
    %v1078 = vld [vmem:[%s8] sm:$0x1]
    %v1080 = vlaneseq
    %v1081 = vshrl.u32 %v1080, 7
    %v1082 = vsub.s32 0, %v1081
    %v1083 = vrot.slane %v1078, %v1082
    %v1101 = vunpack.c.l.b16 %v1062
    %v1102 = vunpack.c.l.b16 %v1063
    %v1103 = vunpack.c.l.b16 %v1064
    %v1104 = vunpack.c.l.b16 %v1065
    %v1105 = vunpack.c.l.b16 %v1066
    %v1106 = vunpack.c.l.b16 %v1067
    %v1107 = vunpack.c.l.b16 %v1068
    %v1108 = vunpack.c.l.b16 %v1069
    %v1109 = vunpack.c.l.b16 %v1070
    %v1110 = vunpack.c.l.b16 %v1071
    %v1111 = vunpack.c.l.b16 %v1072
    %v1112 = vunpack.c.l.b16 %v1073
    %v1113 = vunpack.c.l.b16 %v1074
    %v1114 = vunpack.c.l.b16 %v1075
    %v1115 = vunpack.c.l.b16 %v1076
    %v1116 = vunpack.c.l.b16 %v1077
    %v1117 = vpack.c.b16 %v1102, %v1101
    %v1118 = vpack.c.b16 %v1104, %v1103
    %v1119 = vpack.c.b16 %v1106, %v1105
    %v1120 = vpack.c.b16 %v1108, %v1107
    %v1121 = vpack.c.b16 %v1110, %v1109
    %v1122 = vpack.c.b16 %v1112, %v1111
    %v1123 = vpack.c.b16 %v1114, %v1113
    %v1124 = vpack.c.b16 %v1116, %v1115
    %1133 = vmatprep.subr.bf16.mxu0 0
    %1134 = vmatpush1.bf16.msra.mxu0 %v1117
    %1135 = vmatprep.subr.bf16.mxu0 0
    %1136 = vmatpush1.bf16.msra.mxu0 %v1118
    %1137 = vmatprep.subr.bf16.mxu0 0
    %1138 = vmatpush1.bf16.msra.mxu0 %v1119
    %1139 = vmatprep.subr.bf16.mxu0 0
    %1140 = vmatpush1.bf16.msra.mxu0 %v1120
    %1141 = vmatprep.subr.bf16.mxu0 0
    %1142 = vmatpush1.bf16.msra.mxu0 %v1121
    %1143 = vmatprep.subr.bf16.mxu0 0
    %1144 = vmatpush1.bf16.msra.mxu0 %v1122
    %1145 = vmatprep.subr.bf16.mxu0 0
    %1146 = vmatpush1.bf16.msra.mxu0 %v1123
    %1147 = vmatprep.subr.bf16.mxu0 0
    %1148 = vmatpush1.bf16.msra.mxu0 %v1124
    %1149 = vmatprep.subr.bf16.mxu0 0
    %1150 = vmatpush1.bf16.msra.mxu0 0
    %1151 = vmatprep.subr.bf16.mxu0 0
    %1152 = vmatpush1.bf16.msra.mxu0 0
    %1153 = vmatprep.subr.bf16.mxu0 0
    %1154 = vmatpush1.bf16.msra.mxu0 0
    %1155 = vmatprep.subr.bf16.mxu0 0
    %1156 = vmatpush1.bf16.msra.mxu0 0
    %1157 = vmatprep.subr.bf16.mxu0 0
    %1158 = vmatpush1.bf16.msra.mxu0 0
    %1159 = vmatprep.subr.bf16.mxu0 0
    %1160 = vmatpush1.bf16.msra.mxu0 0
    %1161 = vmatprep.subr.bf16.mxu0 0
    %1162 = vmatpush1.bf16.msra.mxu0 0
    %1163 = vmatprep.subr.bf16.mxu0 0
    %1164 = vmatpush1.bf16.msra.mxu0 0
    %1165 = vmatprep.mubr.bf16.mxu0 0
    %1166 = vmatmul.mubr.bf16.gmra.mrb[0].mxu0 %v1061
    %v1167 = vpop.f32.mrb[0].mxu0
    %v1168 = vadd.f32 %v1083, %v1167
    %v1169 = vpop.f32.mrb[0].mxu0
    %v1170 = vpop.f32.mrb[0].mxu0
    %v1171 = vpop.f32.mrb[0].mxu0
    %1172 = vdwg.mxu0
    %v1173 = vmax.f32 %v1168, 0.0
    %v1174 = vpack.c.bf16 %v1173, %v1173
    %v1175 = vld [vmem:[#allocation11] sm:$0xf]
    %v1176 = vld [vmem:[#allocation11 + $0x4] sm:$0xf]
    %v1177 = vld [vmem:[#allocation11 + $0x8] sm:$0xf]
    %v1178 = vld [vmem:[#allocation11 + $0xc] sm:$0xf]
    %v1179 = vld [vmem:[#allocation11 + $0x10] sm:$0xf]
    %v1180 = vld [vmem:[#allocation11 + $0x14] sm:$0xf]
    %v1181 = vld [vmem:[#allocation11 + $0x18] sm:$0xf]
    %v1182 = vld [vmem:[#allocation11 + $0x1c] sm:$0xf]
    %v1183 = vld [vmem:[#allocation11 + $0x20] sm:$0xf]
    %v1184 = vld [vmem:[#allocation11 + $0x24] sm:$0xf]
    %v1185 = vld [vmem:[#allocation11 + $0x28] sm:$0xf]
    %v1186 = vld [vmem:[#allocation11 + $0x2c] sm:$0xf]
    %v1187 = vld [vmem:[#allocation11 + $0x30] sm:$0xf]
    %v1188 = vld [vmem:[#allocation11 + $0x34] sm:$0xf]
    %v1189 = vld [vmem:[#allocation11 + $0x38] sm:$0xf]
    %v1190 = vld [vmem:[#allocation11 + $0x3c] sm:$0xf]
    %v1191 = vld [vmem:[%s10] sm:$0x1]
    %v1193 = vlaneseq
    %v1194 = vshrl.u32 %v1193, 7
    %v1195 = vsub.s32 0, %v1194
    %v1196 = vrot.slane %v1191, %v1195
    %v1214 = vunpack.c.l.b16 %v1175
    %v1215 = vunpack.c.l.b16 %v1176
    %v1216 = vunpack.c.l.b16 %v1177
    %v1217 = vunpack.c.l.b16 %v1178
    %v1218 = vunpack.c.l.b16 %v1179
    %v1219 = vunpack.c.l.b16 %v1180
    %v1220 = vunpack.c.l.b16 %v1181
    %v1221 = vunpack.c.l.b16 %v1182
    %v1222 = vunpack.c.l.b16 %v1183
    %v1223 = vunpack.c.l.b16 %v1184
    %v1224 = vunpack.c.l.b16 %v1185
    %v1225 = vunpack.c.l.b16 %v1186
    %v1226 = vunpack.c.l.b16 %v1187
    %v1227 = vunpack.c.l.b16 %v1188
    %v1228 = vunpack.c.l.b16 %v1189
    %v1229 = vunpack.c.l.b16 %v1190
    %v1230 = vpack.c.b16 %v1215, %v1214
    %v1231 = vpack.c.b16 %v1217, %v1216
    %v1232 = vpack.c.b16 %v1219, %v1218
    %v1233 = vpack.c.b16 %v1221, %v1220
    %v1234 = vpack.c.b16 %v1223, %v1222
    %v1235 = vpack.c.b16 %v1225, %v1224
    %v1236 = vpack.c.b16 %v1227, %v1226
    %v1237 = vpack.c.b16 %v1229, %v1228
    %1246 = vmatprep.subr.bf16.mxu0 0
    %1247 = vmatpush1.bf16.msra.mxu0 %v1230
    %1248 = vmatprep.subr.bf16.mxu0 0
    %1249 = vmatpush1.bf16.msra.mxu0 %v1231
    %1250 = vmatprep.subr.bf16.mxu0 0
    %1251 = vmatpush1.bf16.msra.mxu0 %v1232
    %1252 = vmatprep.subr.bf16.mxu0 0
    %1253 = vmatpush1.bf16.msra.mxu0 %v1233
    %1254 = vmatprep.subr.bf16.mxu0 0
    %1255 = vmatpush1.bf16.msra.mxu0 %v1234
    %1256 = vmatprep.subr.bf16.mxu0 0
    %1257 = vmatpush1.bf16.msra.mxu0 %v1235
    %1258 = vmatprep.subr.bf16.mxu0 0
    %1259 = vmatpush1.bf16.msra.mxu0 %v1236
    %1260 = vmatprep.subr.bf16.mxu0 0
    %1261 = vmatpush1.bf16.msra.mxu0 %v1237
    %1262 = vmatprep.subr.bf16.mxu0 0
    %1263 = vmatpush1.bf16.msra.mxu0 0
    %1264 = vmatprep.subr.bf16.mxu0 0
    %1265 = vmatpush1.bf16.msra.mxu0 0
    %1266 = vmatprep.subr.bf16.mxu0 0
    %1267 = vmatpush1.bf16.msra.mxu0 0
    %1268 = vmatprep.subr.bf16.mxu0 0
    %1269 = vmatpush1.bf16.msra.mxu0 0
    %1270 = vmatprep.subr.bf16.mxu0 0
    %1271 = vmatpush1.bf16.msra.mxu0 0
    %1272 = vmatprep.subr.bf16.mxu0 0
    %1273 = vmatpush1.bf16.msra.mxu0 0
    %1274 = vmatprep.subr.bf16.mxu0 0
    %1275 = vmatpush1.bf16.msra.mxu0 0
    %1276 = vmatprep.subr.bf16.mxu0 0
    %1277 = vmatpush1.bf16.msra.mxu0 0
    %1278 = vmatprep.mubr.bf16.mxu0 0
    %1279 = vmatmul.mubr.bf16.gmra.mrb[0].mxu0 %v1174
    %v1280 = vpop.f32.mrb[0].mxu0
    %v1281 = vadd.f32 %v1196, %v1280
    %v1282 = vpop.f32.mrb[0].mxu0
    %v1283 = vpop.f32.mrb[0].mxu0
    %v1284 = vpop.f32.mrb[0].mxu0
    %1285 = vdwg.mxu0
    %v1286 = vmax.f32 %v1281, 0.0
    %v1287 = vpack.c.bf16 %v1286, %v1286
    %v1288 = vld [vmem:[#allocation13] sm:$0xf]
    %v1289 = vld [vmem:[#allocation13 + $0x4] sm:$0xf]
    %v1290 = vld [vmem:[#allocation13 + $0x8] sm:$0xf]
    %v1291 = vld [vmem:[#allocation13 + $0xc] sm:$0xf]
    %v1292 = vld [vmem:[#allocation13 + $0x10] sm:$0xf]
    %v1293 = vld [vmem:[#allocation13 + $0x14] sm:$0xf]
    %v1294 = vld [vmem:[#allocation13 + $0x18] sm:$0xf]
    %v1295 = vld [vmem:[#allocation13 + $0x1c] sm:$0xf]
    %v1296 = vld [vmem:[#allocation13 + $0x20] sm:$0xf]
    %v1297 = vld [vmem:[#allocation13 + $0x24] sm:$0xf]
    %v1298 = vld [vmem:[#allocation13 + $0x28] sm:$0xf]
    %v1299 = vld [vmem:[#allocation13 + $0x2c] sm:$0xf]
    %v1300 = vld [vmem:[#allocation13 + $0x30] sm:$0xf]
    %v1301 = vld [vmem:[#allocation13 + $0x34] sm:$0xf]
    %v1302 = vld [vmem:[#allocation13 + $0x38] sm:$0xf]
    %v1303 = vld [vmem:[#allocation13 + $0x3c] sm:$0xf]
    %v1304 = vld [vmem:[%s12] sm:$0x1]
    %v1306 = vlaneseq
    %v1307 = vshrl.u32 %v1306, 7
    %v1308 = vsub.s32 0, %v1307
    %v1309 = vrot.slane %v1304, %v1308
    %v1327 = vunpack.c.l.b16 %v1288
    %v1328 = vunpack.c.l.b16 %v1289
    %v1329 = vunpack.c.l.b16 %v1290
    %v1330 = vunpack.c.l.b16 %v1291
    %v1331 = vunpack.c.l.b16 %v1292
    %v1332 = vunpack.c.l.b16 %v1293
    %v1333 = vunpack.c.l.b16 %v1294
    %v1334 = vunpack.c.l.b16 %v1295
    %v1335 = vunpack.c.l.b16 %v1296
    %v1336 = vunpack.c.l.b16 %v1297
    %v1337 = vunpack.c.l.b16 %v1298
    %v1338 = vunpack.c.l.b16 %v1299
    %v1339 = vunpack.c.l.b16 %v1300
    %v1340 = vunpack.c.l.b16 %v1301
    %v1341 = vunpack.c.l.b16 %v1302
    %v1342 = vunpack.c.l.b16 %v1303
    %v1343 = vpack.c.b16 %v1328, %v1327
    %v1344 = vpack.c.b16 %v1330, %v1329
    %v1345 = vpack.c.b16 %v1332, %v1331
    %v1346 = vpack.c.b16 %v1334, %v1333
    %v1347 = vpack.c.b16 %v1336, %v1335
    %v1348 = vpack.c.b16 %v1338, %v1337
    %v1349 = vpack.c.b16 %v1340, %v1339
    %v1350 = vpack.c.b16 %v1342, %v1341
    %1359 = vmatprep.subr.bf16.mxu0 0
    %1360 = vmatpush1.bf16.msra.mxu0 %v1343
    %1361 = vmatprep.subr.bf16.mxu0 0
    %1362 = vmatpush1.bf16.msra.mxu0 %v1344
    %1363 = vmatprep.subr.bf16.mxu0 0
    %1364 = vmatpush1.bf16.msra.mxu0 %v1345
    %1365 = vmatprep.subr.bf16.mxu0 0
    %1366 = vmatpush1.bf16.msra.mxu0 %v1346
    %1367 = vmatprep.subr.bf16.mxu0 0
    %1368 = vmatpush1.bf16.msra.mxu0 %v1347
    %1369 = vmatprep.subr.bf16.mxu0 0
    %1370 = vmatpush1.bf16.msra.mxu0 %v1348
    %1371 = vmatprep.subr.bf16.mxu0 0
    %1372 = vmatpush1.bf16.msra.mxu0 %v1349
    %1373 = vmatprep.subr.bf16.mxu0 0
    %1374 = vmatpush1.bf16.msra.mxu0 %v1350
    %1375 = vmatprep.subr.bf16.mxu0 0
    %1376 = vmatpush1.bf16.msra.mxu0 0
    %1377 = vmatprep.subr.bf16.mxu0 0
    %1378 = vmatpush1.bf16.msra.mxu0 0
    %1379 = vmatprep.subr.bf16.mxu0 0
    %1380 = vmatpush1.bf16.msra.mxu0 0
    %1381 = vmatprep.subr.bf16.mxu0 0
    %1382 = vmatpush1.bf16.msra.mxu0 0
    %1383 = vmatprep.subr.bf16.mxu0 0
    %1384 = vmatpush1.bf16.msra.mxu0 0
    %1385 = vmatprep.subr.bf16.mxu0 0
    %1386 = vmatpush1.bf16.msra.mxu0 0
    %1387 = vmatprep.subr.bf16.mxu0 0
    %1388 = vmatpush1.bf16.msra.mxu0 0
    %1389 = vmatprep.subr.bf16.mxu0 0
    %1390 = vmatpush1.bf16.msra.mxu0 0
    %1391 = vmatprep.mubr.bf16.mxu0 0
    %1392 = vmatmul.mubr.bf16.gmra.mrb[0].mxu0 %v1287
    %v1393 = vpop.f32.mrb[0].mxu0
    %v1394 = vadd.f32 %v1309, %v1393
    %v1395 = vpop.f32.mrb[0].mxu0
    %v1396 = vpop.f32.mrb[0].mxu0
    %v1397 = vpop.f32.mrb[0].mxu0
    %1398 = vdwg.mxu0
    %1399 = vmax.xlane.f32.xlu0 %v1394
    %v1400 = vpop.xlane.xlu0 %1399
    %v1401 = vsub.f32 %v1394, %v1400
    %v1402 = vmul.f32 %v1401, 1.442695
    %v1403 = vpow.pop %v1402
    %1404 = vadd.xlane.f32.xlu0 %v1403
    %v1405 = vpop.xlane.xlu0 %1404
    %v1406 = vlog2.pop %v1405
    %v1407 = vmul.f32 %v1406, 0.6931472
    %v1408 = vsub.f32 %v1401, %v1407
    %1409 = vst [vmem:[#allocation14] sm:$0xff] %v1408
    // Predicated region
    $region82: #{tpu_custom_call.1} parent=1 // pred_check
      _
    $region83: #{tpu_custom_call.1} parent=1 // pred_check_branch
      %1411 = sbr.rel (0) target = $region85
    $region84: #{tpu_custom_call.1} parent=1 // pred_region
      %s1413 = ssub.s32 128, 128
      %1414 = vsyncadd [#allocation4], %s1413
      %s1416 = sshll.u32 [#allocation14], 4
      %s1417 = int_to_ptr.vmem [resolvable:$true] %s1416
      %1419 = dma.vmem_to_hbm [thread:$0]  %s1417, 128, %s13, [#allocation4]
    $region85: #{tpu_custom_call.1} parent=1 // pred_fallthru
      _
    // Predicated region
    $region86: #{tpu_custom_call.1} parent=1 // pred_check
      _
    $region87: #{tpu_custom_call.1} parent=1 // pred_check_branch
      %1421 = sbr.rel (0) target = $region89
    $region88: #{tpu_custom_call.1} parent=1 // pred_region
      %1422 = dma.done [#allocation4], 128
    $region89: #{tpu_custom_call.1} parent=1 // pred_fallthru
      _
    %1423 = vsyncpa [#allocation3], 1
    %1424 = vsyncpa [#allocation6], 1
    %1425 = vsyncpa [#allocation9], 1
    %1426 = vsyncpa [#allocation12], 1
    %1427 = vsyncpa [#allocation4], 1

</llo_original>
